<compile_context>
chip_gen: v5e
topology: v5e:2x2
jax: 0.10.0
libtpu: 0.0.40
codegen_flags: <defaults>
</compile_context>

<pallas_src>
import jax
import jax.numpy as jnp
import numpy as np
from jax.experimental import pallas as pl
from jax.experimental.pallas import tpu as pltpu

jax.config.update("jax_default_matmul_precision", "highest")


# ---------------------------------------------------------------------------
# Small numeric helpers (shared by kernel and reference)
# ---------------------------------------------------------------------------
def lstm_gates(gates, c_prev):
    H = c_prev.shape[-1]
    i = jax.nn.sigmoid(gates[:, 0 * H:1 * H])
    f = jax.nn.sigmoid(gates[:, 1 * H:2 * H])
    g = jnp.tanh(gates[:, 2 * H:3 * H])
    o = jax.nn.sigmoid(gates[:, 3 * H:4 * H])
    c_new = f * c_prev + i * g
    h_new = o * jnp.tanh(c_new)
    return h_new, c_new


# ---------------------------------------------------------------------------
# Pallas kernel: one invocation, in-kernel fori_loop over target time.
# ---------------------------------------------------------------------------
def memory_decoder_kernel(
        emb_g_ref,                      # [T,B,4H] precomputed emb @ w_ih0_e + b0
        src_b_ref, qa_b_ref,            # [B,S,H], [B,W,H] memory banks
        keys_p_ref, keys_q_ref,         # [B,S,H], [B,W,H] precomputed bank @ wm
        madd_p_ref, madd_q_ref,         # [B,S], [B,W] additive masks (0 / -1e9)
        h_init_ref, c_init_ref,         # [2,B,H]
        w0h_ref, w1_ref, b1_ref,        # fused LSTM weights [2H,4H],[2H,4H],[1,4H]
        wq_ref,                         # fused query projection [H,2H]
        v_p_ref, wc_p_ref, v_q_ref, wc_q_ref,   # [1,H] each
        w_out_ref,                      # fused linear_out [2H,H]
        # outputs
        dec_out_ref, std_attn_ref, qa_attn_ref, cov_out_ref, cov2_out_ref,
        h_fin_ref, c_fin_ref):

    T = dec_out_ref.shape[0]
    B, S, H = src_b_ref.shape
    W = qa_b_ref.shape[1]

    # Loop-invariant loads — once per kernel, not per timestep.
    src_b = src_b_ref[...]
    qa_b = qa_b_ref[...]
    keys_p = keys_p_ref[...]
    keys_q = keys_q_ref[...]
    madd_p = madd_p_ref[...]
    madd_q = madd_q_ref[...]
    w0h = w0h_ref[...]
    w1 = w1_ref[...]
    b1 = b1_ref[...]
    wq = wq_ref[...]
    v_p = v_p_ref[...]
    wc_p = wc_p_ref[...]
    v_q = v_q_ref[...]
    wc_q = wc_q_ref[...]
    w_out = w_out_ref[...]

    def attend(q, keys, bank, madd, cov, v, wc):
        # q [B,H], keys/bank [B,L,H], madd/cov [B,L], v/wc [1,H]
        e = jnp.tanh(q[:, None, :] + keys + cov[:, :, None] * wc[None])
        scores = jnp.sum(e * v[None], axis=-1) + madd              # [B,L]
        m = jnp.max(scores, axis=-1, keepdims=True)
        ex = jnp.exp(scores - m)
        attn = ex / jnp.sum(ex, axis=-1, keepdims=True)
        # MXU batched contraction for the context vector.
        ctx = jnp.einsum('bqs,bsh->bqh', attn[:, None, :], bank,
                         preferred_element_type=jnp.float32)[:, 0]
        return ctx, attn

    def step(t, carry):
        h0, h1, c0, c1, feed, cov, cov2 = carry

        # StackedLSTM layer 0 (input = [emb_t ; input_feed]); emb part precomputed.
        gates0 = emb_g_ref[t] + jnp.dot(
            jnp.concatenate([feed, h0], axis=-1), w0h,
            preferred_element_type=jnp.float32)
        h0n, c0n = lstm_gates(gates0, c0)

        # StackedLSTM layer 1.
        gates1 = jnp.dot(jnp.concatenate([h0n, h1], axis=-1), w1,
                         preferred_element_type=jnp.float32) + b1
        h1n, c1n = lstm_gates(gates1, c1)
        rnn_out = h1n

        # Hierarchical-style attention (passage + QA-word) with coverage.
        q_all = jnp.dot(rnn_out, wq, preferred_element_type=jnp.float32)   # [B,2H]
        ctx_p, attn_p = attend(q_all[:, :H], keys_p, src_b, madd_p, cov, v_p, wc_p)
        ctx_q, attn_q = attend(q_all[:, H:], keys_q, qa_b, madd_q, cov2, v_q, wc_q)
        src_ctx = 0.5 * (ctx_p + ctx_q)

        # decoder_output = tanh(linear_out(cat([ctx, rnn_out], 1)))
        dec_out = jnp.tanh(jnp.dot(
            jnp.concatenate([src_ctx, rnn_out], axis=-1), w_out,
            preferred_element_type=jnp.float32))

        # Coverage update (first step: coverage is None -> becomes attn).
        is_first = t == 0
        new_cov = jnp.where(is_first, attn_p,
                            0.85 * cov + 0.15 * jnp.exp(-attn_p))
        new_cov2 = jnp.where(is_first, attn_q,
                             0.85 * cov2 + 0.15 * jnp.exp(-attn_q))

        dec_out_ref[t] = dec_out
        std_attn_ref[t] = attn_p     # attns['std'] == attns['passage'] == attns['p_cov']
        qa_attn_ref[t] = attn_q      # attns['qa']  == attns['qa_cov']
        cov_out_ref[t] = new_cov     # attns['coverage']
        cov2_out_ref[t] = new_cov2   # attns['coverage2']
        return h0n, h1n, c0n, c1n, dec_out, new_cov, new_cov2

    carry0 = (h_init_ref[0], h_init_ref[1], c_init_ref[0], c_init_ref[1],
              jnp.zeros((B, H), jnp.float32),    # input_feed starts at zeros
              jnp.zeros((B, S), jnp.float32),    # coverage  (None -> zero term)
              jnp.zeros((B, W), jnp.float32))    # coverage2
    h0f, h1f, c0f, c1f, _, _, _ = jax.lax.fori_loop(0, T, step, carry0)

    # Final hidden state written once, after the loop.
    h_fin_ref[0] = h0f
    h_fin_ref[1] = h1f
    c_fin_ref[0] = c0f
    c_fin_ref[1] = c1f


def memory_decoder_forward(tgt, src_bank, src_lengths, qa_sent_bank, qa_sent_lengths,
                           qa_word_bank, qa_word_lengths, h_init, c_init, params):
    """tgt: [T,B] int32; banks in PyTorch layout [len, batch, hidden]."""
    del qa_sent_bank, qa_sent_lengths  # TODO(synk): sentence-level QA hierarchy unused
    T, B = tgt.shape
    H = params["w_out_c"].shape[0]
    L = h_init.shape[0]
    assert L == 2, "StackedLSTM is hard-wired for num_layers=2"
    f32 = jnp.float32

    emb = params["emb_table"][tgt].astype(f32)                       # [T,B,E]
    src_b = jnp.transpose(src_bank, (1, 0, 2)).astype(f32)           # [B,S,H]
    qa_b = jnp.transpose(qa_word_bank, (1, 0, 2)).astype(f32)        # [B,W,H]
    S, W = src_b.shape[1], qa_b.shape[1]

    # Additive attention masks: 0 for valid, -1e9 for padding.
    madd_p = ((jnp.arange(S)[None, :] < src_lengths[:, None]).astype(f32) - 1.0) * 1e9
    madd_q = ((jnp.arange(W)[None, :] < qa_word_lengths[:, None]).astype(f32) - 1.0) * 1e9

    # Loop-invariant hoisting (single large matmuls, off the sequential path).
    emb_g = (jnp.einsum('tbe,eh->tbh', emb, params["w_ih0_e"],
                        preferred_element_type=f32) + params["b0"][None])     # [T,B,4H]
    keys_p = jnp.einsum('bsh,hk->bsk', src_b, params["wm_p"],
                        preferred_element_type=f32)                           # [B,S,H]
    keys_q = jnp.einsum('bsh,hk->bsk', qa_b, params["wm_q"],
                        preferred_element_type=f32)                           # [B,W,H]

    # Fused recurrent / projection weights.
    w0h = jnp.concatenate([params["w_ih0_h"], params["w_hh0"]], axis=0)       # [2H,4H]
    w1 = jnp.concatenate([params["w_ih1"], params["w_hh1"]], axis=0)          # [2H,4H]
    wq = jnp.concatenate([params["wq_p"], params["wq_q"]], axis=1)            # [H,2H]
    w_out = jnp.concatenate([params["w_out_c"], params["w_out_h"]], axis=0)   # [2H,H]

    inputs = [emb_g, src_b, qa_b, keys_p, keys_q, madd_p, madd_q,
              h_init.astype(f32), c_init.astype(f32),
              w0h, w1, params["b1"], wq,
              params["v_p"], params["wc_p"], params["v_q"], params["wc_q"], w_out]

    out_shapes = (
        jax.ShapeDtypeStruct((T, B, H), f32),   # decoder_outputs
        jax.ShapeDtypeStruct((T, B, S), f32),   # attns['std'/'passage'/'p_cov']
        jax.ShapeDtypeStruct((T, B, W), f32),   # attns['qa'/'qa_cov']
        jax.ShapeDtypeStruct((T, B, S), f32),   # attns['coverage']
        jax.ShapeDtypeStruct((T, B, W), f32),   # attns['coverage2']
        jax.ShapeDtypeStruct((L, B, H), f32),   # final hidden h
        jax.ShapeDtypeStruct((L, B, H), f32),   # final hidden c
    )

    vmem = pltpu.MemorySpace.VMEM
    return pl.pallas_call(
        memory_decoder_kernel,
        out_shape=out_shapes,
        in_specs=[pl.BlockSpec(memory_space=vmem)] * len(inputs),
        out_specs=tuple(pl.BlockSpec(memory_space=vmem) for _ in out_shapes),
        compiler_params=pltpu.CompilerParams(
            vmem_limit_bytes=32 * 1024 * 1024),   # explicit scoped-VMEM budget
    )(*inputs)


memory_decoder_forward = jax.jit(memory_decoder_forward)


# ---------------------------------------------------------------------------
# Pure-JAX reference (unfused, mirrors the PyTorch per-step math).
# ---------------------------------------------------------------------------
def _mlp_attention_ref(query, bank, mask, cov, wq, wm, v, wc):
    B, S, H = bank.shape
    q = jnp.dot(query, wq, preferred_element_type=jnp.float32)
    k = jnp.dot(bank.reshape(B * S, H), wm,
                preferred_element_type=jnp.float32).reshape(B, S, H)
    e = jnp.tanh(q[:, None, :] + k + cov[:, :, None] * wc[None])
    scores = jnp.sum(e * v[None], axis=-1)
    scores = jnp.where(mask > 0.5, scores, -1e9)
    m = jnp.max(scores, axis=-1, keepdims=True)
    ex = jnp.exp(scores - m)
    attn = ex / jnp.sum(ex, axis=-1, keepdims=True)
    ctx = jnp.sum(attn[:, :, None] * bank, axis=1)
    return ctx, attn


def _decoder_step_ref(emb_t, feed, h_prev, c_prev, cov_in, cov2_in,
                      src_b, qa_b, src_mask, qa_mask, p):
    gates0 = (jnp.dot(emb_t, p["w_ih0_e"], preferred_element_type=jnp.float32)
              + jnp.dot(feed, p["w_ih0_h"], preferred_element_type=jnp.float32)
              + jnp.dot(h_prev[0], p["w_hh0"], preferred_element_type=jnp.float32)
              + p["b0"])
    h0, c0 = lstm_gates(gates0, c_prev[0])
    gates1 = (jnp.dot(h0, p["w_ih1"], preferred_element_type=jnp.float32)
              + jnp.dot(h_prev[1], p["w_hh1"], preferred_element_type=jnp.float32)
              + p["b1"])
    h1, c1 = lstm_gates(gates1, c_prev[1])
    rnn_out = h1
    ctx_p, attn_p = _mlp_attention_ref(rnn_out, src_b, src_mask, cov_in,
                                       p["wq_p"], p["wm_p"], p["v_p"], p["wc_p"])
    ctx_q, attn_q = _mlp_attention_ref(rnn_out, qa_b, qa_mask, cov2_in,
                                       p["wq_q"], p["wm_q"], p["v_q"], p["wc_q"])
    src_context = 0.5 * (ctx_p + ctx_q)
    dec_out = jnp.tanh(
        jnp.dot(src_context, p["w_out_c"], preferred_element_type=jnp.float32)
        + jnp.dot(rnn_out, p["w_out_h"], preferred_element_type=jnp.float32))
    return dec_out, (h0, h1), (c0, c1), attn_p, attn_q


def reference_forward(tgt, src_bank, src_lengths, qa_sent_bank, qa_sent_lengths,
                      qa_word_bank, qa_word_lengths, h_init, c_init, params):
    del qa_sent_bank, qa_sent_lengths
    emb = params["emb_table"][tgt].astype(jnp.float32)
    src_b = jnp.transpose(src_bank, (1, 0, 2)).astype(jnp.float32)
    qa_b = jnp.transpose(qa_word_bank, (1, 0, 2)).astype(jnp.float32)
    T, B, _ = emb.shape
    H = params["w_out_c"].shape[0]
    S, W = src_b.shape[1], qa_b.shape[1]
    src_mask = (jnp.arange(S)[None, :] < src_lengths[:, None]).astype(jnp.float32)
    qa_mask = (jnp.arange(W)[None, :] < qa_word_lengths[:, None]).astype(jnp.float32)

    h = (h_init[0], h_init[1])
    c = (c_init[0], c_init[1])
    feed = jnp.zeros((B, H), jnp.float32)
    cov = None
    cov2 = None
    outs, stds, qas, covs, cov2s = [], [], [], [], []
    for t in range(T):
        cov_in = jnp.zeros((B, S), jnp.float32) if cov is None else cov
        cov2_in = jnp.zeros((B, W), jnp.float32) if cov2 is None else cov2
        dec_out, h, c, a_p, a_q = _decoder_step_ref(
            emb[t], feed, h, c, cov_in, cov2_in, src_b, qa_b, src_mask, qa_mask, params)
        feed = dec_out
        cov = a_p if cov is None else 0.85 * cov + 0.15 * jnp.exp(-a_p)
        cov2 = a_q if cov2 is None else 0.85 * cov2 + 0.15 * jnp.exp(-a_q)
        outs.append(dec_out); stds.append(a_p); qas.append(a_q)
        covs.append(cov); cov2s.append(cov2)
    return (jnp.stack(outs), jnp.stack(stds), jnp.stack(qas),
            jnp.stack(covs), jnp.stack(cov2s), jnp.stack(h), jnp.stack(c))


if __name__ == "__main__":
    T, B, E, H, L = 4, 2, 16, 32, 2      # tgt_len, batch, emb, hidden, num_layers
    S, Q, W = 8, 4, 12                   # src_len, qa_sent_len, qa_word_len
    V = 50                               # vocab

    key = jax.random.PRNGKey(0)
    ks = iter(jax.random.split(key, 32))

    def nrm(shape, scale=0.1):
        return (scale * jax.random.normal(next(ks), shape)).astype(jnp.float32)

    params = {
        "emb_table": nrm((V, E), 0.5),
        "w_ih0_e": nrm((E, 4 * H)), "w_ih0_h": nrm((H, 4 * H)),
        "w_hh0": nrm((H, 4 * H)), "b0": nrm((1, 4 * H)),
        "w_ih1": nrm((H, 4 * H)), "w_hh1": nrm((H, 4 * H)), "b1": nrm((1, 4 * H)),
        "wq_p": nrm((H, H)), "wm_p": nrm((H, H)), "v_p": nrm((1, H)), "wc_p": nrm((1, H)),
        "wq_q": nrm((H, H)), "wm_q": nrm((H, H)), "v_q": nrm((1, H)), "wc_q": nrm((1, H)),
        "w_out_c": nrm((H, H)), "w_out_h": nrm((H, H)),
    }

    tgt = jax.random.randint(next(ks), (T, B), 0, V, dtype=jnp.int32)  # [tgt_len, batch]
    src_bank = nrm((S, B, H), 1.0)
    qa_sent_bank = nrm((Q, B, H), 1.0)
    qa_word_bank = nrm((W, B, H), 1.0)
    src_lengths = jnp.array([S, S - 3], dtype=jnp.int32)
    qa_sent_lengths = jnp.array([Q, Q - 1], dtype=jnp.int32)
    qa_word_lengths = jnp.array([W, W - 5], dtype=jnp.int32)
    h_init = nrm((L, B, H), 0.2)
    c_init = nrm((L, B, H), 0.2)

    outs = memory_decoder_forward(tgt, src_bank, src_lengths, qa_sent_bank,
                                  qa_sent_lengths, qa_word_bank, qa_word_lengths,
                                  h_init, c_init, params)
    outs = jax.block_until_ready(outs)

    ref = reference_forward(tgt, src_bank, src_lengths, qa_sent_bank,
                            qa_sent_lengths, qa_word_bank, qa_word_lengths,
                            h_init, c_init, params)
    for a, b in zip(outs, ref):
        np.testing.assert_allclose(np.asarray(a), np.asarray(b), rtol=2e-4, atol=2e-4)

    print("KERNEL_OK")
</pallas_src>

<mosaic_0001>
module attributes {stable_mosaic.version = 11 : i64} {
  func.func @memory_decoder_kernel(%arg0: memref<4x2x128xf32, #tpu.memory_space<vmem>>, %arg1: memref<2x8x32xf32, #tpu.memory_space<vmem>>, %arg2: memref<2x12x32xf32, #tpu.memory_space<vmem>>, %arg3: memref<2x8x32xf32, #tpu.memory_space<vmem>>, %arg4: memref<2x12x32xf32, #tpu.memory_space<vmem>>, %arg5: memref<2x8xf32, #tpu.memory_space<vmem>>, %arg6: memref<2x12xf32, #tpu.memory_space<vmem>>, %arg7: memref<2x2x32xf32, #tpu.memory_space<vmem>>, %arg8: memref<2x2x32xf32, #tpu.memory_space<vmem>>, %arg9: memref<64x128xf32, #tpu.memory_space<vmem>>, %arg10: memref<64x128xf32, #tpu.memory_space<vmem>>, %arg11: memref<1x128xf32, #tpu.memory_space<vmem>>, %arg12: memref<32x64xf32, #tpu.memory_space<vmem>>, %arg13: memref<1x32xf32, #tpu.memory_space<vmem>>, %arg14: memref<1x32xf32, #tpu.memory_space<vmem>>, %arg15: memref<1x32xf32, #tpu.memory_space<vmem>>, %arg16: memref<1x32xf32, #tpu.memory_space<vmem>>, %arg17: memref<64x32xf32, #tpu.memory_space<vmem>>, %arg18: memref<4x2x32xf32, #tpu.memory_space<vmem>>, %arg19: memref<4x2x8xf32, #tpu.memory_space<vmem>>, %arg20: memref<4x2x12xf32, #tpu.memory_space<vmem>>, %arg21: memref<4x2x8xf32, #tpu.memory_space<vmem>>, %arg22: memref<4x2x12xf32, #tpu.memory_space<vmem>>, %arg23: memref<2x2x32xf32, #tpu.memory_space<vmem>>, %arg24: memref<2x2x32xf32, #tpu.memory_space<vmem>>) attributes {dimension_semantics = [], scalar_prefetch = 0 : i64, scratch_operands = 0 : i64, tpu.core_type = #tpu.core_type<tc>} {
    %c0 = arith.constant 0 : index
    %c0_0 = arith.constant 0 : index
    %c0_1 = arith.constant 0 : index
    %0 = vector.load %arg1[%c0, %c0_0, %c0_1] : memref<2x8x32xf32, #tpu.memory_space<vmem>>, vector<2x8x32xf32>
    %c0_2 = arith.constant 0 : index
    %c0_3 = arith.constant 0 : index
    %c0_4 = arith.constant 0 : index
    %1 = vector.load %arg2[%c0_2, %c0_3, %c0_4] : memref<2x12x32xf32, #tpu.memory_space<vmem>>, vector<2x12x32xf32>
    %c0_5 = arith.constant 0 : index
    %c0_6 = arith.constant 0 : index
    %c0_7 = arith.constant 0 : index
    %2 = vector.load %arg3[%c0_5, %c0_6, %c0_7] : memref<2x8x32xf32, #tpu.memory_space<vmem>>, vector<2x8x32xf32>
    %c0_8 = arith.constant 0 : index
    %c0_9 = arith.constant 0 : index
    %c0_10 = arith.constant 0 : index
    %3 = vector.load %arg4[%c0_8, %c0_9, %c0_10] : memref<2x12x32xf32, #tpu.memory_space<vmem>>, vector<2x12x32xf32>
    %c0_11 = arith.constant 0 : index
    %c0_12 = arith.constant 0 : index
    %4 = vector.load %arg5[%c0_11, %c0_12] : memref<2x8xf32, #tpu.memory_space<vmem>>, vector<2x8xf32>
    %c0_13 = arith.constant 0 : index
    %c0_14 = arith.constant 0 : index
    %5 = vector.load %arg6[%c0_13, %c0_14] : memref<2x12xf32, #tpu.memory_space<vmem>>, vector<2x12xf32>
    %c0_15 = arith.constant 0 : index
    %c0_16 = arith.constant 0 : index
    %6 = vector.load %arg9[%c0_15, %c0_16] : memref<64x128xf32, #tpu.memory_space<vmem>>, vector<64x128xf32>
    %c0_17 = arith.constant 0 : index
    %c0_18 = arith.constant 0 : index
    %7 = vector.load %arg10[%c0_17, %c0_18] : memref<64x128xf32, #tpu.memory_space<vmem>>, vector<64x128xf32>
    %c0_19 = arith.constant 0 : index
    %c0_20 = arith.constant 0 : index
    %8 = vector.load %arg11[%c0_19, %c0_20] : memref<1x128xf32, #tpu.memory_space<vmem>>, vector<1x128xf32>
    %c0_21 = arith.constant 0 : index
    %c0_22 = arith.constant 0 : index
    %9 = vector.load %arg12[%c0_21, %c0_22] : memref<32x64xf32, #tpu.memory_space<vmem>>, vector<32x64xf32>
    %c0_23 = arith.constant 0 : index
    %c0_24 = arith.constant 0 : index
    %10 = vector.load %arg13[%c0_23, %c0_24] : memref<1x32xf32, #tpu.memory_space<vmem>>, vector<1x32xf32>
    %c0_25 = arith.constant 0 : index
    %c0_26 = arith.constant 0 : index
    %11 = vector.load %arg14[%c0_25, %c0_26] : memref<1x32xf32, #tpu.memory_space<vmem>>, vector<1x32xf32>
    %c0_27 = arith.constant 0 : index
    %c0_28 = arith.constant 0 : index
    %12 = vector.load %arg15[%c0_27, %c0_28] : memref<1x32xf32, #tpu.memory_space<vmem>>, vector<1x32xf32>
    %c0_29 = arith.constant 0 : index
    %c0_30 = arith.constant 0 : index
    %13 = vector.load %arg16[%c0_29, %c0_30] : memref<1x32xf32, #tpu.memory_space<vmem>>, vector<1x32xf32>
    %c0_31 = arith.constant 0 : index
    %c0_32 = arith.constant 0 : index
    %14 = vector.load %arg17[%c0_31, %c0_32] : memref<64x32xf32, #tpu.memory_space<vmem>>, vector<64x32xf32>
    %c0_33 = arith.constant 0 : index
    %c0_34 = arith.constant 0 : index
    %c0_35 = arith.constant 0 : index
    %15 = vector.load %arg7[%c0_33, %c0_34, %c0_35] : memref<2x2x32xf32, #tpu.memory_space<vmem>>, vector<1x2x32xf32>
    %16 = vector.shape_cast %15 : vector<1x2x32xf32> to vector<2x32xf32>
    %c1 = arith.constant 1 : index
    %c0_36 = arith.constant 0 : index
    %c0_37 = arith.constant 0 : index
    %17 = vector.load %arg7[%c1, %c0_36, %c0_37] : memref<2x2x32xf32, #tpu.memory_space<vmem>>, vector<1x2x32xf32>
    %18 = vector.shape_cast %17 : vector<1x2x32xf32> to vector<2x32xf32>
    %c0_38 = arith.constant 0 : index
    %c0_39 = arith.constant 0 : index
    %c0_40 = arith.constant 0 : index
    %19 = vector.load %arg8[%c0_38, %c0_39, %c0_40] : memref<2x2x32xf32, #tpu.memory_space<vmem>>, vector<1x2x32xf32>
    %20 = vector.shape_cast %19 : vector<1x2x32xf32> to vector<2x32xf32>
    %c1_41 = arith.constant 1 : index
    %c0_42 = arith.constant 0 : index
    %c0_43 = arith.constant 0 : index
    %21 = vector.load %arg8[%c1_41, %c0_42, %c0_43] : memref<2x2x32xf32, #tpu.memory_space<vmem>>, vector<1x2x32xf32>
    %22 = vector.shape_cast %21 : vector<1x2x32xf32> to vector<2x32xf32>
    %cst = arith.constant 0.000000e+00 : f32
    %23 = vector.broadcast %cst : f32 to vector<2x32xf32>
    %cst_44 = arith.constant 0.000000e+00 : f32
    %24 = vector.broadcast %cst_44 : f32 to vector<2x8xf32>
    %cst_45 = arith.constant 0.000000e+00 : f32
    %25 = vector.broadcast %cst_45 : f32 to vector<2x12xf32>
    %c0_i32 = arith.constant 0 : i32
    %c4_i32 = arith.constant 4 : i32
    %26 = arith.addi %c0_i32, %c4_i32 : i32
    %c1_i32 = arith.constant 1 : i32
    %27:7 = scf.for %arg25 = %c0_i32 to %26 step %c1_i32 iter_args(%arg26 = %16, %arg27 = %18, %arg28 = %20, %arg29 = %22, %arg30 = %23, %arg31 = %24, %arg32 = %25) -> (vector<2x32xf32>, vector<2x32xf32>, vector<2x32xf32>, vector<2x32xf32>, vector<2x32xf32>, vector<2x8xf32>, vector<2x12xf32>)  : i32 {
      %40 = arith.index_cast %arg25 : i32 to index
      %c0_59 = arith.constant 0 : index
      %c0_60 = arith.constant 0 : index
      %41 = vector.load %arg0[%40, %c0_59, %c0_60] : memref<4x2x128xf32, #tpu.memory_space<vmem>>, vector<1x2x128xf32>
      %42 = vector.shape_cast %41 : vector<1x2x128xf32> to vector<2x128xf32>
      %43 = tpu.concatenate %arg30, %arg26 in 1 : vector<2x32xf32>, vector<2x32xf32> -> vector<2x64xf32>
      %cst_61 = arith.constant dense<0.000000e+00> : vector<2x128xf32>
      %44 = tpu.matmul %43, %6, %cst_61 {dimension_numbers = #tpu.dot_dimension_numbers<[1], [0], [0], [1], [0, 0, 1, 1], [], []>, precision = #tpu.contract_precision<fp32>} : vector<2x64xf32>, vector<64x128xf32>, vector<2x128xf32> -> vector<2x128xf32>
      %45 = arith.addf %42, %44 : vector<2x128xf32>
      %46 = vector.extract_strided_slice %45 {offsets = [0, 0], sizes = [2, 32], strides = [1, 1]} : vector<2x128xf32> to vector<2x32xf32>
      %47 = arith.negf %46 : vector<2x32xf32>
      %48 = math.exp %47 : vector<2x32xf32>
      %cst_62 = arith.constant 1.000000e+00 : f32
      %49 = vector.broadcast %cst_62 : f32 to vector<2x32xf32>
      %50 = arith.addf %49, %48 : vector<2x32xf32>
      %51 = arith.divf %49, %50 : vector<2x32xf32>
      %52 = vector.extract_strided_slice %45 {offsets = [0, 32], sizes = [2, 32], strides = [1, 1]} : vector<2x128xf32> to vector<2x32xf32>
      %53 = arith.negf %52 : vector<2x32xf32>
      %54 = math.exp %53 : vector<2x32xf32>
      %cst_63 = arith.constant 1.000000e+00 : f32
      %55 = vector.broadcast %cst_63 : f32 to vector<2x32xf32>
      %56 = arith.addf %55, %54 : vector<2x32xf32>
      %57 = arith.divf %55, %56 : vector<2x32xf32>
      %58 = vector.extract_strided_slice %45 {offsets = [0, 64], sizes = [2, 32], strides = [1, 1]} : vector<2x128xf32> to vector<2x32xf32>
      %59 = math.tanh %58 : vector<2x32xf32>
      %60 = vector.extract_strided_slice %45 {offsets = [0, 96], sizes = [2, 32], strides = [1, 1]} : vector<2x128xf32> to vector<2x32xf32>
      %61 = arith.negf %60 : vector<2x32xf32>
      %62 = math.exp %61 : vector<2x32xf32>
      %cst_64 = arith.constant 1.000000e+00 : f32
      %63 = vector.broadcast %cst_64 : f32 to vector<2x32xf32>
      %64 = arith.addf %63, %62 : vector<2x32xf32>
      %65 = arith.divf %63, %64 : vector<2x32xf32>
      %66 = arith.mulf %57, %arg28 : vector<2x32xf32>
      %67 = arith.mulf %51, %59 : vector<2x32xf32>
      %68 = arith.addf %66, %67 : vector<2x32xf32>
      %69 = math.tanh %68 : vector<2x32xf32>
      %70 = arith.mulf %65, %69 : vector<2x32xf32>
      %71 = tpu.concatenate %70, %arg27 in 1 : vector<2x32xf32>, vector<2x32xf32> -> vector<2x64xf32>
      %cst_65 = arith.constant dense<0.000000e+00> : vector<2x128xf32>
      %72 = tpu.matmul %71, %7, %cst_65 {dimension_numbers = #tpu.dot_dimension_numbers<[1], [0], [0], [1], [0, 0, 1, 1], [], []>, precision = #tpu.contract_precision<fp32>} : vector<2x64xf32>, vector<64x128xf32>, vector<2x128xf32> -> vector<2x128xf32>
      %73 = vector.broadcast %8 : vector<1x128xf32> to vector<2x128xf32>
      %74 = arith.addf %72, %73 : vector<2x128xf32>
      %75 = vector.extract_strided_slice %74 {offsets = [0, 0], sizes = [2, 32], strides = [1, 1]} : vector<2x128xf32> to vector<2x32xf32>
      %76 = arith.negf %75 : vector<2x32xf32>
      %77 = math.exp %76 : vector<2x32xf32>
      %cst_66 = arith.constant 1.000000e+00 : f32
      %78 = vector.broadcast %cst_66 : f32 to vector<2x32xf32>
      %79 = arith.addf %78, %77 : vector<2x32xf32>
      %80 = arith.divf %78, %79 : vector<2x32xf32>
      %81 = vector.extract_strided_slice %74 {offsets = [0, 32], sizes = [2, 32], strides = [1, 1]} : vector<2x128xf32> to vector<2x32xf32>
      %82 = arith.negf %81 : vector<2x32xf32>
      %83 = math.exp %82 : vector<2x32xf32>
      %cst_67 = arith.constant 1.000000e+00 : f32
      %84 = vector.broadcast %cst_67 : f32 to vector<2x32xf32>
      %85 = arith.addf %84, %83 : vector<2x32xf32>
      %86 = arith.divf %84, %85 : vector<2x32xf32>
      %87 = vector.extract_strided_slice %74 {offsets = [0, 64], sizes = [2, 32], strides = [1, 1]} : vector<2x128xf32> to vector<2x32xf32>
      %88 = math.tanh %87 : vector<2x32xf32>
      %89 = vector.extract_strided_slice %74 {offsets = [0, 96], sizes = [2, 32], strides = [1, 1]} : vector<2x128xf32> to vector<2x32xf32>
      %90 = arith.negf %89 : vector<2x32xf32>
      %91 = math.exp %90 : vector<2x32xf32>
      %cst_68 = arith.constant 1.000000e+00 : f32
      %92 = vector.broadcast %cst_68 : f32 to vector<2x32xf32>
      %93 = arith.addf %92, %91 : vector<2x32xf32>
      %94 = arith.divf %92, %93 : vector<2x32xf32>
      %95 = arith.mulf %86, %arg29 : vector<2x32xf32>
      %96 = arith.mulf %80, %88 : vector<2x32xf32>
      %97 = arith.addf %95, %96 : vector<2x32xf32>
      %98 = math.tanh %97 : vector<2x32xf32>
      %99 = arith.mulf %94, %98 : vector<2x32xf32>
      %cst_69 = arith.constant dense<0.000000e+00> : vector<2x64xf32>
      %100 = tpu.matmul %99, %9, %cst_69 {dimension_numbers = #tpu.dot_dimension_numbers<[1], [0], [0], [1], [0, 0, 1, 1], [], []>, precision = #tpu.contract_precision<fp32>} : vector<2x32xf32>, vector<32x64xf32>, vector<2x64xf32> -> vector<2x64xf32>
      %101 = vector.extract_strided_slice %100 {offsets = [0, 0], sizes = [2, 32], strides = [1, 1]} : vector<2x64xf32> to vector<2x32xf32>
      %102 = vector.shape_cast %101 : vector<2x32xf32> to vector<2x1x32xf32>
      %103 = vector.broadcast %102 : vector<2x1x32xf32> to vector<2x8x32xf32>
      %104 = arith.addf %103, %2 : vector<2x8x32xf32>
      %105 = vector.shape_cast %arg31 : vector<2x8xf32> to vector<2x8x1xf32>
      %106 = vector.shape_cast %11 : vector<1x32xf32> to vector<1x1x32xf32>
      %107 = vector.broadcast %105 : vector<2x8x1xf32> to vector<2x8x32xf32>
      %108 = vector.broadcast %106 : vector<1x1x32xf32> to vector<2x8x32xf32>
      %109 = arith.mulf %107, %108 : vector<2x8x32xf32>
      %110 = arith.addf %104, %109 : vector<2x8x32xf32>
      %111 = math.tanh %110 : vector<2x8x32xf32>
      %112 = vector.shape_cast %10 : vector<1x32xf32> to vector<1x1x32xf32>
      %113 = vector.broadcast %112 : vector<1x1x32xf32> to vector<2x8x32xf32>
      %114 = arith.mulf %111, %113 : vector<2x8x32xf32>
      %cst_70 = arith.constant dense<0.000000e+00> : vector<2x8xf32>
      %115 = vector.multi_reduction <add>, %114, %cst_70 [2] : vector<2x8x32xf32> to vector<2x8xf32>
      %116 = arith.addf %115, %4 : vector<2x8xf32>
      %cst_71 = arith.constant dense<0xFF800000> : vector<2xf32>
      %117 = vector.multi_reduction <maximumf>, %116, %cst_71 [1] : vector<2x8xf32> to vector<2xf32>
      %118 = vector.shape_cast %117 : vector<2xf32> to vector<2x1xf32>
      %119 = vector.broadcast %118 : vector<2x1xf32> to vector<2x8xf32>
      %120 = arith.subf %116, %119 : vector<2x8xf32>
      %121 = math.exp %120 : vector<2x8xf32>
      %cst_72 = arith.constant dense<0.000000e+00> : vector<2xf32>
      %122 = vector.multi_reduction <add>, %121, %cst_72 [1] : vector<2x8xf32> to vector<2xf32>
      %123 = vector.shape_cast %122 : vector<2xf32> to vector<2x1xf32>
      %124 = vector.broadcast %123 : vector<2x1xf32> to vector<2x8xf32>
      %125 = arith.divf %121, %124 : vector<2x8xf32>
      %126 = vector.shape_cast %125 : vector<2x8xf32> to vector<2x1x8xf32>
      "tpu.trace_start"() <{level = 10 : i32, message = "bqs,bsh->bqh"}> : () -> ()
      %cst_73 = arith.constant dense<0.000000e+00> : vector<2x1x32xf32>
      %127 = tpu.matmul %126, %0, %cst_73 {dimension_numbers = #tpu.dot_dimension_numbers<[2], [1], [1], [2], [0, 0, 0, 1, 1, 2], [0], [0]>, precision = #tpu.contract_precision<fp32>} : vector<2x1x8xf32>, vector<2x8x32xf32>, vector<2x1x32xf32> -> vector<2x1x32xf32>
      "tpu.trace_stop"() : () -> ()
      %128 = vector.shape_cast %127 : vector<2x1x32xf32> to vector<2x32xf32>
      %129 = vector.extract_strided_slice %100 {offsets = [0, 32], sizes = [2, 32], strides = [1, 1]} : vector<2x64xf32> to vector<2x32xf32>
      %130 = vector.shape_cast %129 : vector<2x32xf32> to vector<2x1x32xf32>
      %131 = vector.broadcast %130 : vector<2x1x32xf32> to vector<2x12x32xf32>
      %132 = arith.addf %131, %3 : vector<2x12x32xf32>
      %133 = vector.shape_cast %arg32 : vector<2x12xf32> to vector<2x12x1xf32>
      %134 = vector.shape_cast %13 : vector<1x32xf32> to vector<1x1x32xf32>
      %135 = vector.broadcast %133 : vector<2x12x1xf32> to vector<2x12x32xf32>
      %136 = vector.broadcast %134 : vector<1x1x32xf32> to vector<2x12x32xf32>
      %137 = arith.mulf %135, %136 : vector<2x12x32xf32>
      %138 = arith.addf %132, %137 : vector<2x12x32xf32>
      %139 = math.tanh %138 : vector<2x12x32xf32>
      %140 = vector.shape_cast %12 : vector<1x32xf32> to vector<1x1x32xf32>
      %141 = vector.broadcast %140 : vector<1x1x32xf32> to vector<2x12x32xf32>
      %142 = arith.mulf %139, %141 : vector<2x12x32xf32>
      %cst_74 = arith.constant dense<0.000000e+00> : vector<2x12xf32>
      %143 = vector.multi_reduction <add>, %142, %cst_74 [2] : vector<2x12x32xf32> to vector<2x12xf32>
      %144 = arith.addf %143, %5 : vector<2x12xf32>
      %cst_75 = arith.constant dense<0xFF800000> : vector<2xf32>
      %145 = vector.multi_reduction <maximumf>, %144, %cst_75 [1] : vector<2x12xf32> to vector<2xf32>
      %146 = vector.shape_cast %145 : vector<2xf32> to vector<2x1xf32>
      %147 = vector.broadcast %146 : vector<2x1xf32> to vector<2x12xf32>
      %148 = arith.subf %144, %147 : vector<2x12xf32>
      %149 = math.exp %148 : vector<2x12xf32>
      %cst_76 = arith.constant dense<0.000000e+00> : vector<2xf32>
      %150 = vector.multi_reduction <add>, %149, %cst_76 [1] : vector<2x12xf32> to vector<2xf32>
      %151 = vector.shape_cast %150 : vector<2xf32> to vector<2x1xf32>
      %152 = vector.broadcast %151 : vector<2x1xf32> to vector<2x12xf32>
      %153 = arith.divf %149, %152 : vector<2x12xf32>
      %154 = vector.shape_cast %153 : vector<2x12xf32> to vector<2x1x12xf32>
      "tpu.trace_start"() <{level = 10 : i32, message = "bqs,bsh->bqh"}> : () -> ()
      %cst_77 = arith.constant dense<0.000000e+00> : vector<2x1x32xf32>
      %155 = tpu.matmul %154, %1, %cst_77 {dimension_numbers = #tpu.dot_dimension_numbers<[2], [1], [1], [2], [0, 0, 0, 1, 1, 2], [0], [0]>, precision = #tpu.contract_precision<fp32>} : vector<2x1x12xf32>, vector<2x12x32xf32>, vector<2x1x32xf32> -> vector<2x1x32xf32>
      "tpu.trace_stop"() : () -> ()
      %156 = vector.shape_cast %155 : vector<2x1x32xf32> to vector<2x32xf32>
      %157 = arith.addf %128, %156 : vector<2x32xf32>
      %cst_78 = arith.constant 5.000000e-01 : f32
      %158 = vector.broadcast %cst_78 : f32 to vector<2x32xf32>
      %159 = arith.mulf %158, %157 : vector<2x32xf32>
      %160 = tpu.concatenate %159, %99 in 1 : vector<2x32xf32>, vector<2x32xf32> -> vector<2x64xf32>
      %cst_79 = arith.constant dense<0.000000e+00> : vector<2x32xf32>
      %161 = tpu.matmul %160, %14, %cst_79 {dimension_numbers = #tpu.dot_dimension_numbers<[1], [0], [0], [1], [0, 0, 1, 1], [], []>, precision = #tpu.contract_precision<fp32>} : vector<2x64xf32>, vector<64x32xf32>, vector<2x32xf32> -> vector<2x32xf32>
      %162 = math.tanh %161 : vector<2x32xf32>
      %c0_i32_80 = arith.constant 0 : i32
      %163 = arith.cmpi eq, %arg25, %c0_i32_80 : i32
      %cst_81 = arith.constant 8.500000e-01 : f32
      %164 = vector.broadcast %cst_81 : f32 to vector<2x8xf32>
      %165 = arith.mulf %164, %arg31 : vector<2x8xf32>
      %cst_82 = arith.constant 0.000000e+00 : f32
      %166 = vector.broadcast %cst_82 : f32 to vector<2x8xf32>
      %167 = arith.subf %166, %125 : vector<2x8xf32>
      %168 = math.exp %167 : vector<2x8xf32>
      %cst_83 = arith.constant 1.500000e-01 : f32
      %169 = vector.broadcast %cst_83 : f32 to vector<2x8xf32>
      %170 = arith.mulf %169, %168 : vector<2x8xf32>
      %171 = arith.addf %165, %170 : vector<2x8xf32>
      %172 = arith.select %163, %125, %171 : vector<2x8xf32>
      %cst_84 = arith.constant 8.500000e-01 : f32
      %173 = vector.broadcast %cst_84 : f32 to vector<2x12xf32>
      %174 = arith.mulf %173, %arg32 : vector<2x12xf32>
      %cst_85 = arith.constant 0.000000e+00 : f32
      %175 = vector.broadcast %cst_85 : f32 to vector<2x12xf32>
      %176 = arith.subf %175, %153 : vector<2x12xf32>
      %177 = math.exp %176 : vector<2x12xf32>
      %cst_86 = arith.constant 1.500000e-01 : f32
      %178 = vector.broadcast %cst_86 : f32 to vector<2x12xf32>
      %179 = arith.mulf %178, %177 : vector<2x12xf32>
      %180 = arith.addf %174, %179 : vector<2x12xf32>
      %181 = arith.select %163, %153, %180 : vector<2x12xf32>
      %182 = arith.index_cast %arg25 : i32 to index
      %c0_87 = arith.constant 0 : index
      %c0_88 = arith.constant 0 : index
      %183 = vector.load %arg18[%182, %c0_87, %c0_88] : memref<4x2x32xf32, #tpu.memory_space<vmem>>, vector<1x2x32xf32>
      %184 = vector.shape_cast %183 : vector<1x2x32xf32> to vector<2x32xf32>
      %185 = vector.shape_cast %162 : vector<2x32xf32> to vector<1x2x32xf32>
      tpu.vector_store %arg18[%182, %c0_87, %c0_88], %185 {strides = array<i32>} : memref<4x2x32xf32, #tpu.memory_space<vmem>>, vector<1x2x32xf32>,
      %186 = arith.index_cast %arg25 : i32 to index
      %c0_89 = arith.constant 0 : index
      %c0_90 = arith.constant 0 : index
      %187 = vector.load %arg19[%186, %c0_89, %c0_90] : memref<4x2x8xf32, #tpu.memory_space<vmem>>, vector<1x2x8xf32>
      %188 = vector.shape_cast %187 : vector<1x2x8xf32> to vector<2x8xf32>
      %189 = vector.shape_cast %125 : vector<2x8xf32> to vector<1x2x8xf32>
      tpu.vector_store %arg19[%186, %c0_89, %c0_90], %189 {strides = array<i32>} : memref<4x2x8xf32, #tpu.memory_space<vmem>>, vector<1x2x8xf32>,
      %190 = arith.index_cast %arg25 : i32 to index
      %c0_91 = arith.constant 0 : index
      %c0_92 = arith.constant 0 : index
      %191 = vector.load %arg20[%190, %c0_91, %c0_92] : memref<4x2x12xf32, #tpu.memory_space<vmem>>, vector<1x2x12xf32>
      %192 = vector.shape_cast %191 : vector<1x2x12xf32> to vector<2x12xf32>
      %193 = vector.shape_cast %153 : vector<2x12xf32> to vector<1x2x12xf32>
      tpu.vector_store %arg20[%190, %c0_91, %c0_92], %193 {strides = array<i32>} : memref<4x2x12xf32, #tpu.memory_space<vmem>>, vector<1x2x12xf32>,
      %194 = arith.index_cast %arg25 : i32 to index
      %c0_93 = arith.constant 0 : index
      %c0_94 = arith.constant 0 : index
      %195 = vector.load %arg21[%194, %c0_93, %c0_94] : memref<4x2x8xf32, #tpu.memory_space<vmem>>, vector<1x2x8xf32>
      %196 = vector.shape_cast %195 : vector<1x2x8xf32> to vector<2x8xf32>
      %197 = vector.shape_cast %172 : vector<2x8xf32> to vector<1x2x8xf32>
      tpu.vector_store %arg21[%194, %c0_93, %c0_94], %197 {strides = array<i32>} : memref<4x2x8xf32, #tpu.memory_space<vmem>>, vector<1x2x8xf32>,
      %198 = arith.index_cast %arg25 : i32 to index
      %c0_95 = arith.constant 0 : index
      %c0_96 = arith.constant 0 : index
      %199 = vector.load %arg22[%198, %c0_95, %c0_96] : memref<4x2x12xf32, #tpu.memory_space<vmem>>, vector<1x2x12xf32>
      %200 = vector.shape_cast %199 : vector<1x2x12xf32> to vector<2x12xf32>
      %201 = vector.shape_cast %181 : vector<2x12xf32> to vector<1x2x12xf32>
      tpu.vector_store %arg22[%198, %c0_95, %c0_96], %201 {strides = array<i32>} : memref<4x2x12xf32, #tpu.memory_space<vmem>>, vector<1x2x12xf32>,
      scf.yield %70, %99, %68, %97, %162, %172, %181 : vector<2x32xf32>, vector<2x32xf32>, vector<2x32xf32>, vector<2x32xf32>, vector<2x32xf32>, vector<2x8xf32>, vector<2x12xf32>
    }
    %c4_i32_46 = arith.constant 4 : i32
    %c0_47 = arith.constant 0 : index
    %c0_48 = arith.constant 0 : index
    %c0_49 = arith.constant 0 : index
    %28 = vector.load %arg23[%c0_47, %c0_48, %c0_49] : memref<2x2x32xf32, #tpu.memory_space<vmem>>, vector<1x2x32xf32>
    %29 = vector.shape_cast %28 : vector<1x2x32xf32> to vector<2x32xf32>
    %30 = vector.shape_cast %27#0 : vector<2x32xf32> to vector<1x2x32xf32>
    tpu.vector_store %arg23[%c0_47, %c0_48, %c0_49], %30 {strides = array<i32>} : memref<2x2x32xf32, #tpu.memory_space<vmem>>, vector<1x2x32xf32>,
    %c1_50 = arith.constant 1 : index
    %c0_51 = arith.constant 0 : index
    %c0_52 = arith.constant 0 : index
    %31 = vector.load %arg23[%c1_50, %c0_51, %c0_52] : memref<2x2x32xf32, #tpu.memory_space<vmem>>, vector<1x2x32xf32>
    %32 = vector.shape_cast %31 : vector<1x2x32xf32> to vector<2x32xf32>
    %33 = vector.shape_cast %27#1 : vector<2x32xf32> to vector<1x2x32xf32>
    tpu.vector_store %arg23[%c1_50, %c0_51, %c0_52], %33 {strides = array<i32>} : memref<2x2x32xf32, #tpu.memory_space<vmem>>, vector<1x2x32xf32>,
    %c0_53 = arith.constant 0 : index
    %c0_54 = arith.constant 0 : index
    %c0_55 = arith.constant 0 : index
    %34 = vector.load %arg24[%c0_53, %c0_54, %c0_55] : memref<2x2x32xf32, #tpu.memory_space<vmem>>, vector<1x2x32xf32>
    %35 = vector.shape_cast %34 : vector<1x2x32xf32> to vector<2x32xf32>
    %36 = vector.shape_cast %27#2 : vector<2x32xf32> to vector<1x2x32xf32>
    tpu.vector_store %arg24[%c0_53, %c0_54, %c0_55], %36 {strides = array<i32>} : memref<2x2x32xf32, #tpu.memory_space<vmem>>, vector<1x2x32xf32>,
    %c1_56 = arith.constant 1 : index
    %c0_57 = arith.constant 0 : index
    %c0_58 = arith.constant 0 : index
    %37 = vector.load %arg24[%c1_56, %c0_57, %c0_58] : memref<2x2x32xf32, #tpu.memory_space<vmem>>, vector<1x2x32xf32>
    %38 = vector.shape_cast %37 : vector<1x2x32xf32> to vector<2x32xf32>
    %39 = vector.shape_cast %27#3 : vector<2x32xf32> to vector<1x2x32xf32>
    tpu.vector_store %arg24[%c1_56, %c0_57, %c0_58], %39 {strides = array<i32>} : memref<2x2x32xf32, #tpu.memory_space<vmem>>, vector<1x2x32xf32>,
    return
  }
}

</mosaic_0001>

<llo_original>
// kernel: memory_decoder_forward.1
$region0: #{memory_decoder_forward.1}
  #allocation0 [shape = 'u32[]', space=smem, size = 0x4, offset = 0x4, fixed_abs, tag = 'smem constant byte address 0x4 - core index']
  #allocation1 [shape = 'u32[72,128]{1,0:T(1,128)}', space=vmem, size = 0x9000, scoped, tag = 'internal scratch']
  %s0 = inlined_call_operand.vmem [shape: f32[4,2,128], index: 0, kind: input, shape index: {}]
  %s1 = inlined_call_operand.vmem [shape: f32[2,8,32], index: 1, kind: input, shape index: {}]
  %s2 = inlined_call_operand.vmem [shape: f32[2,12,32], index: 2, kind: input, shape index: {}]
  %s3 = inlined_call_operand.vmem [shape: f32[2,8,32], index: 3, kind: input, shape index: {}]
  %s4 = inlined_call_operand.vmem [shape: f32[2,12,32], index: 4, kind: input, shape index: {}]
  %s5 = inlined_call_operand.vmem [shape: f32[2,8], index: 5, kind: input, shape index: {}]
  %s6 = inlined_call_operand.vmem [shape: f32[2,12], index: 6, kind: input, shape index: {}]
  %s7 = inlined_call_operand.vmem [shape: f32[2,2,32], index: 7, kind: input, shape index: {}]
  %s8 = inlined_call_operand.vmem [shape: f32[2,2,32], index: 8, kind: input, shape index: {}]
  %s9 = inlined_call_operand.vmem [shape: f32[64,128], index: 9, kind: input, shape index: {}]
  %s10 = inlined_call_operand.vmem [shape: f32[64,128], index: 10, kind: input, shape index: {}]
  %s11 = inlined_call_operand.vmem [shape: f32[1,128], index: 11, kind: input, shape index: {}]
  %s12 = inlined_call_operand.vmem [shape: f32[32,64], index: 12, kind: input, shape index: {}]
  %s13 = inlined_call_operand.vmem [shape: f32[1,32], index: 13, kind: input, shape index: {}]
  %s14 = inlined_call_operand.vmem [shape: f32[1,32], index: 14, kind: input, shape index: {}]
  %s15 = inlined_call_operand.vmem [shape: f32[1,32], index: 15, kind: input, shape index: {}]
  %s16 = inlined_call_operand.vmem [shape: f32[1,32], index: 16, kind: input, shape index: {}]
  %s17 = inlined_call_operand.vmem [shape: f32[64,32], index: 17, kind: input, shape index: {}]
  %s18 = inlined_call_operand.hbm [shape: f32[4,2,32], index: 18, kind: output, shape index: {0}]
  %s19 = inlined_call_operand.hbm [shape: f32[4,2,8], index: 19, kind: output, shape index: {1}]
  %s20 = inlined_call_operand.hbm [shape: f32[4,2,12], index: 20, kind: output, shape index: {2}]
  %s21 = inlined_call_operand.hbm [shape: f32[4,2,8], index: 21, kind: output, shape index: {3}]
  %s22 = inlined_call_operand.hbm [shape: f32[4,2,12], index: 22, kind: output, shape index: {4}]
  %s23 = inlined_call_operand.hbm [shape: f32[2,2,32], index: 23, kind: output, shape index: {5}]
  %s24 = inlined_call_operand.hbm [shape: f32[2,2,32], index: 24, kind: output, shape index: {6}]
  %25 = xla_tuple %s18, %s19, %s20, %s21, %s22, %s23, %s24
  %s26 = sld [smem:[#allocation0]]
  $region137: #{memory_decoder_forward.1} parent=0
    _
  %s28 = ssub.s32 1, %s26
  %s29 = scalar_select 0, %s28, %s26
  $region1: #{memory_decoder_forward.1} parent=0
    #allocation2 [shape = 'u8[4096]{0}', space=vmem, size = 0x1000, scoped, tag = 'output window, operand 0, single buffered']
    #allocation3 [shape = 's32[1]{0}', space=sflag, size = 0x4, scoped, tag = 'scoped memory for memory_decoder_forward.1']
    #allocation4 [shape = 'u8[4096]{0}', space=vmem, size = 0x1000, scoped, tag = 'output window, operand 1, single buffered']
    #allocation5 [shape = 's32[1]{0}', space=sflag, size = 0x4, scoped, tag = 'scoped memory for memory_decoder_forward.1']
    #allocation6 [shape = 'u8[4096]{0}', space=vmem, size = 0x1000, scoped, tag = 'output window, operand 2, single buffered']
    #allocation7 [shape = 'u8[4096]{0}', space=vmem, size = 0x1000, scoped, tag = 'output window, operand 3, single buffered']
    #allocation8 [shape = 's32[1]{0}', space=sflag, size = 0x4, scoped, tag = 'scoped memory for memory_decoder_forward.1']
    #allocation9 [shape = 'u8[4096]{0}', space=vmem, size = 0x1000, scoped, tag = 'output window, operand 4, single buffered']
    #allocation10 [shape = 'u8[2048]{0}', space=vmem, size = 0x800, scoped, tag = 'output window, operand 5, single buffered']
    #allocation11 [shape = 's32[1]{0}', space=sflag, size = 0x4, scoped, tag = 'scoped memory for memory_decoder_forward.1']
    #allocation12 [shape = 'u8[2048]{0}', space=vmem, size = 0x800, scoped, tag = 'output window, operand 6, single buffered']
    %30 = vsyncpa [#allocation3], 0
    %31 = vsyncpa [#allocation5], 0
    %32 = vsyncpa [#allocation8], 0
    %33 = vsyncpa [#allocation11], 0
    // Predicated region
    $region2: #{memory_decoder_forward.1} parent=1 // pred_check
      _
    $region3: #{memory_decoder_forward.1} parent=1 // pred_check_branch
      %35 = sbr.rel (0) target = $region5
    $region4: #{memory_decoder_forward.1} parent=1 // pred_region
      _
    $region5: #{memory_decoder_forward.1} parent=1 // pred_fallthru
      _
    // Predicated region
    $region6: #{memory_decoder_forward.1} parent=1 // pred_check
      _
    $region7: #{memory_decoder_forward.1} parent=1 // pred_check_branch
      %37 = sbr.rel (0) target = $region9
    $region8: #{memory_decoder_forward.1} parent=1 // pred_region
      _
    $region9: #{memory_decoder_forward.1} parent=1 // pred_fallthru
      _
    // Predicated region
    $region10: #{memory_decoder_forward.1} parent=1 // pred_check
      _
    $region11: #{memory_decoder_forward.1} parent=1 // pred_check_branch
      %39 = sbr.rel (0) target = $region13
    $region12: #{memory_decoder_forward.1} parent=1 // pred_region
      _
    $region13: #{memory_decoder_forward.1} parent=1 // pred_fallthru
      _
    // Predicated region
    $region14: #{memory_decoder_forward.1} parent=1 // pred_check
      _
    $region15: #{memory_decoder_forward.1} parent=1 // pred_check_branch
      %41 = sbr.rel (0) target = $region17
    $region16: #{memory_decoder_forward.1} parent=1 // pred_region
      _
    $region17: #{memory_decoder_forward.1} parent=1 // pred_fallthru
      _
    // Predicated region
    $region18: #{memory_decoder_forward.1} parent=1 // pred_check
      _
    $region19: #{memory_decoder_forward.1} parent=1 // pred_check_branch
      %43 = sbr.rel (0) target = $region21
    $region20: #{memory_decoder_forward.1} parent=1 // pred_region
      _
    $region21: #{memory_decoder_forward.1} parent=1 // pred_fallthru
      _
    // Predicated region
    $region22: #{memory_decoder_forward.1} parent=1 // pred_check
      _
    $region23: #{memory_decoder_forward.1} parent=1 // pred_check_branch
      %45 = sbr.rel (0) target = $region25
    $region24: #{memory_decoder_forward.1} parent=1 // pred_region
      _
    $region25: #{memory_decoder_forward.1} parent=1 // pred_fallthru
      _
    // Predicated region
    $region26: #{memory_decoder_forward.1} parent=1 // pred_check
      _
    $region27: #{memory_decoder_forward.1} parent=1 // pred_check_branch
      %47 = sbr.rel (0) target = $region29
    $region28: #{memory_decoder_forward.1} parent=1 // pred_region
      _
    $region29: #{memory_decoder_forward.1} parent=1 // pred_fallthru
      _
    // Predicated region
    $region30: #{memory_decoder_forward.1} parent=1 // pred_check
      _
    $region31: #{memory_decoder_forward.1} parent=1 // pred_check_branch
      %49 = sbr.rel (0) target = $region33
    $region32: #{memory_decoder_forward.1} parent=1 // pred_region
      _
    $region33: #{memory_decoder_forward.1} parent=1 // pred_fallthru
      _
    // Predicated region
    $region34: #{memory_decoder_forward.1} parent=1 // pred_check
      _
    $region35: #{memory_decoder_forward.1} parent=1 // pred_check_branch
      %51 = sbr.rel (0) target = $region37
    $region36: #{memory_decoder_forward.1} parent=1 // pred_region
      _
    $region37: #{memory_decoder_forward.1} parent=1 // pred_fallthru
      _
    // Predicated region
    $region38: #{memory_decoder_forward.1} parent=1 // pred_check
      _
    $region39: #{memory_decoder_forward.1} parent=1 // pred_check_branch
      %53 = sbr.rel (0) target = $region41
    $region40: #{memory_decoder_forward.1} parent=1 // pred_region
      _
    $region41: #{memory_decoder_forward.1} parent=1 // pred_fallthru
      _
    // Predicated region
    $region42: #{memory_decoder_forward.1} parent=1 // pred_check
      _
    $region43: #{memory_decoder_forward.1} parent=1 // pred_check_branch
      %55 = sbr.rel (0) target = $region45
    $region44: #{memory_decoder_forward.1} parent=1 // pred_region
      _
    $region45: #{memory_decoder_forward.1} parent=1 // pred_fallthru
      _
    // Predicated region
    $region46: #{memory_decoder_forward.1} parent=1 // pred_check
      _
    $region47: #{memory_decoder_forward.1} parent=1 // pred_check_branch
      %57 = sbr.rel (0) target = $region49
    $region48: #{memory_decoder_forward.1} parent=1 // pred_region
      _
    $region49: #{memory_decoder_forward.1} parent=1 // pred_fallthru
      _
    // Predicated region
    $region50: #{memory_decoder_forward.1} parent=1 // pred_check
      _
    $region51: #{memory_decoder_forward.1} parent=1 // pred_check_branch
      %59 = sbr.rel (0) target = $region53
    $region52: #{memory_decoder_forward.1} parent=1 // pred_region
      _
    $region53: #{memory_decoder_forward.1} parent=1 // pred_fallthru
      _
    // Predicated region
    $region54: #{memory_decoder_forward.1} parent=1 // pred_check
      _
    $region55: #{memory_decoder_forward.1} parent=1 // pred_check_branch
      %61 = sbr.rel (0) target = $region57
    $region56: #{memory_decoder_forward.1} parent=1 // pred_region
      _
    $region57: #{memory_decoder_forward.1} parent=1 // pred_fallthru
      _
    // Predicated region
    $region58: #{memory_decoder_forward.1} parent=1 // pred_check
      _
    $region59: #{memory_decoder_forward.1} parent=1 // pred_check_branch
      %63 = sbr.rel (0) target = $region61
    $region60: #{memory_decoder_forward.1} parent=1 // pred_region
      _
    $region61: #{memory_decoder_forward.1} parent=1 // pred_fallthru
      _
    // Predicated region
    $region62: #{memory_decoder_forward.1} parent=1 // pred_check
      _
    $region63: #{memory_decoder_forward.1} parent=1 // pred_check_branch
      %65 = sbr.rel (0) target = $region65
    $region64: #{memory_decoder_forward.1} parent=1 // pred_region
      _
    $region65: #{memory_decoder_forward.1} parent=1 // pred_fallthru
      _
    // Predicated region
    $region66: #{memory_decoder_forward.1} parent=1 // pred_check
      _
    $region67: #{memory_decoder_forward.1} parent=1 // pred_check_branch
      %67 = sbr.rel (0) target = $region69
    $region68: #{memory_decoder_forward.1} parent=1 // pred_region
      _
    $region69: #{memory_decoder_forward.1} parent=1 // pred_fallthru
      _
    // Predicated region
    $region70: #{memory_decoder_forward.1} parent=1 // pred_check
      _
    $region71: #{memory_decoder_forward.1} parent=1 // pred_check_branch
      %69 = sbr.rel (0) target = $region73
    $region72: #{memory_decoder_forward.1} parent=1 // pred_region
      _
    $region73: #{memory_decoder_forward.1} parent=1 // pred_fallthru
      _
    %v70 = vld [vmem:[%s1] sm:$0xff]
    %v71 = vld [vmem:[%s1 + $0x8] sm:$0xff]
    %v72 = vld [vmem:[%s2] sm:$0xff]
    %v73 = vld [vmem:[%s2 + $0x8] sm:$0xf]
    %v74 = vld [vmem:[%s2 + $0x10] sm:$0xff]
    %v75 = vld [vmem:[%s2 + $0x18] sm:$0xf]
    %v76 = vld [vmem:[%s3] sm:$0xff]
    %v77 = vld [vmem:[%s3 + $0x8] sm:$0xff]
    %v78 = vld [vmem:[%s4] sm:$0xff]
    %v79 = vld [vmem:[%s4 + $0x8] sm:$0xf]
    %v80 = vld [vmem:[%s4 + $0x10] sm:$0xff]
    %v81 = vld [vmem:[%s4 + $0x18] sm:$0xf]
    %v82 = vld [vmem:[%s5] sm:$0x3]
    %v83 = vld [vmem:[%s6] sm:$0x3]
    %v84 = vld [vmem:[%s9] sm:$0xff]
    %v85 = vld [vmem:[%s9 + $0x8] sm:$0xff]
    %v86 = vld [vmem:[%s9 + $0x10] sm:$0xff]
    %v87 = vld [vmem:[%s9 + $0x18] sm:$0xff]
    %v88 = vld [vmem:[%s9 + $0x20] sm:$0xff]
    %v89 = vld [vmem:[%s9 + $0x28] sm:$0xff]
    %v90 = vld [vmem:[%s9 + $0x30] sm:$0xff]
    %v91 = vld [vmem:[%s9 + $0x38] sm:$0xff]
    %v92 = vld [vmem:[%s10] sm:$0xff]
    %v93 = vld [vmem:[%s10 + $0x8] sm:$0xff]
    %v94 = vld [vmem:[%s10 + $0x10] sm:$0xff]
    %v95 = vld [vmem:[%s10 + $0x18] sm:$0xff]
    %v96 = vld [vmem:[%s10 + $0x20] sm:$0xff]
    %v97 = vld [vmem:[%s10 + $0x28] sm:$0xff]
    %v98 = vld [vmem:[%s10 + $0x30] sm:$0xff]
    %v99 = vld [vmem:[%s10 + $0x38] sm:$0xff]
    %v100 = vld [vmem:[%s11] sm:$0x1]
    %v101 = vld [vmem:[%s12] sm:$0xff]
    %v102 = vld [vmem:[%s12 + $0x8] sm:$0xff]
    %v103 = vld [vmem:[%s12 + $0x10] sm:$0xff]
    %v104 = vld [vmem:[%s12 + $0x18] sm:$0xff]
    %v105 = vld [vmem:[%s13] sm:$0x1]
    %v106 = vld [vmem:[%s14] sm:$0x1]
    %v107 = vld [vmem:[%s15] sm:$0x1]
    %v108 = vld [vmem:[%s16] sm:$0x1]
    %v109 = vld [vmem:[%s17] sm:$0xff]
    %v110 = vld [vmem:[%s17 + $0x8] sm:$0xff]
    %v111 = vld [vmem:[%s17 + $0x10] sm:$0xff]
    %v112 = vld [vmem:[%s17 + $0x18] sm:$0xff]
    %v113 = vld [vmem:[%s17 + $0x20] sm:$0xff]
    %v114 = vld [vmem:[%s17 + $0x28] sm:$0xff]
    %v115 = vld [vmem:[%s17 + $0x30] sm:$0xff]
    %v116 = vld [vmem:[%s17 + $0x38] sm:$0xff]
    %v117 = vld [vmem:[%s7] sm:$0x3]
    %s118 = scalar_lea.vmem %s7, 2
    %v119 = vld [vmem:[%s118] sm:$0x3]
    %v120 = vld [vmem:[%s8] sm:$0x3]
    %s121 = scalar_lea.vmem %s8, 2
    %v122 = vld [vmem:[%s121] sm:$0x3]
    loop: start=0, step=1, limit=4
    $region74: #{memory_decoder_forward.1} parent=1 // loop_pre_header
      _
    $region75: #{memory_decoder_forward.1} parent=1 // loop_header
      %s124 = sphi 0, %s128
      %p125 = scmp.ge.s32.totalorder %s124, 4
      %v129 = vphi %v117, %v434
      %v130 = vphi %v119, %v727
      %v131 = vphi %v120, %v2320
      %v132 = vphi %v122, %v2324
      %v133 = vphi 0.0, %v2219
      %v134 = vphi 0.0, %v2236
      %v135 = vphi 0.0, %v2237
      %v136 = vphi 0.0, %v2262
      %v137 = vphi 0.0, %v2263
      %v138 = vphi 0.0, %v2264
      %v139 = vphi 0.0, %v2265
    $region76: #{memory_decoder_forward.1} parent=1 // loop_header_branch
      %127 = sbr.rel (%p125) target = $region80
    $region77: #{memory_decoder_forward.1} parent=1 // loop_body
      %s140 = smul.u32 %s124, 2
      %s141 = scalar_lea.vmem %s0, %s140
      %v142 = vld [vmem:[%s141] sm:$0x3]
      %144 = vrot.lane.b32.xlu0 %v129, 32
      %v145 = vpop.permute.xlu0 %144
      %vm147 = vcmask 261120
      %v148 = vsel %vm147, %v133, %v145
      %vm149 = vcmask 523264
      %v151 = vsel %vm149, %v148, 0
      %153 = vmatpush.msra.mxu0 0.0
      %154 = vmatpush.msra.mxu0 0.0
      %155 = vmatpush.msra.mxu0 0.0
      %156 = vmatpush.msra.mxu0 0.0
      %157 = vmatpush.msra.mxu0 0.0
      %158 = vmatpush.msra.mxu0 0.0
      %159 = vmatpush.msra.mxu0 0.0
      %160 = vmatpush.msra.mxu0 0.0
      %v161 = vand.u32 %v91, 4294901760
      %162 = vmatpush.msra.mxu0 %v161
      %v163 = vand.u32 %v90, 4294901760
      %164 = vmatpush.msra.mxu0 %v163
      %v165 = vand.u32 %v89, 4294901760
      %166 = vmatpush.msra.mxu0 %v165
      %v167 = vand.u32 %v88, 4294901760
      %168 = vmatpush.msra.mxu0 %v167
      %v169 = vand.u32 %v87, 4294901760
      %170 = vmatpush.msra.mxu0 %v169
      %v171 = vand.u32 %v86, 4294901760
      %172 = vmatpush.msra.mxu0 %v171
      %v173 = vand.u32 %v85, 4294901760
      %174 = vmatpush.msra.mxu0 %v173
      %v175 = vand.u32 %v84, 4294901760
      %176 = vmatpush.msra.mxu0 %v175
      %v177 = vand.u32 %v151, 4294901760
      %v178 = vsub.f32 %v151, %v177
      %v179 = vand.u32 %v178, 4294901760
      %v180 = vsub.f32 %v178, %v179
      %v181 = vand.u32 %v180, 4294901760
      %182 = vmatmul.f32.gmra.mxu0 %v181
      %v183 = vpop.f32.mrf.mxu0
      %v184 = vadd.f32 0.0, %v183
      %185 = vdwg.mxu0
      %186 = vmatpush.msra.mxu0 0.0
      %187 = vmatpush.msra.mxu0 0.0
      %188 = vmatpush.msra.mxu0 0.0
      %189 = vmatpush.msra.mxu0 0.0
      %190 = vmatpush.msra.mxu0 0.0
      %191 = vmatpush.msra.mxu0 0.0
      %192 = vmatpush.msra.mxu0 0.0
      %193 = vmatpush.msra.mxu0 0.0
      %v194 = vand.u32 %v91, 4294901760
      %v195 = vsub.f32 %v91, %v194
      %v196 = vand.u32 %v195, 4294901760
      %v197 = vsub.f32 %v195, %v196
      %v198 = vand.u32 %v197, 4294901760
      %199 = vmatpush.msra.mxu0 %v198
      %v200 = vand.u32 %v90, 4294901760
      %v201 = vsub.f32 %v90, %v200
      %v202 = vand.u32 %v201, 4294901760
      %v203 = vsub.f32 %v201, %v202
      %v204 = vand.u32 %v203, 4294901760
      %205 = vmatpush.msra.mxu0 %v204
      %v206 = vand.u32 %v89, 4294901760
      %v207 = vsub.f32 %v89, %v206
      %v208 = vand.u32 %v207, 4294901760
      %v209 = vsub.f32 %v207, %v208
      %v210 = vand.u32 %v209, 4294901760
      %211 = vmatpush.msra.mxu0 %v210
      %v212 = vand.u32 %v88, 4294901760
      %v213 = vsub.f32 %v88, %v212
      %v214 = vand.u32 %v213, 4294901760
      %v215 = vsub.f32 %v213, %v214
      %v216 = vand.u32 %v215, 4294901760
      %217 = vmatpush.msra.mxu0 %v216
      %v218 = vand.u32 %v87, 4294901760
      %v219 = vsub.f32 %v87, %v218
      %v220 = vand.u32 %v219, 4294901760
      %v221 = vsub.f32 %v219, %v220
      %v222 = vand.u32 %v221, 4294901760
      %223 = vmatpush.msra.mxu0 %v222
      %v224 = vand.u32 %v86, 4294901760
      %v225 = vsub.f32 %v86, %v224
      %v226 = vand.u32 %v225, 4294901760
      %v227 = vsub.f32 %v225, %v226
      %v228 = vand.u32 %v227, 4294901760
      %229 = vmatpush.msra.mxu0 %v228
      %v230 = vand.u32 %v85, 4294901760
      %v231 = vsub.f32 %v85, %v230
      %v232 = vand.u32 %v231, 4294901760
      %v233 = vsub.f32 %v231, %v232
      %v234 = vand.u32 %v233, 4294901760
      %235 = vmatpush.msra.mxu0 %v234
      %v236 = vand.u32 %v84, 4294901760
      %v237 = vsub.f32 %v84, %v236
      %v238 = vand.u32 %v237, 4294901760
      %v239 = vsub.f32 %v237, %v238
      %v240 = vand.u32 %v239, 4294901760
      %241 = vmatpush.msra.mxu0 %v240
      %v242 = vand.u32 %v151, 4294901760
      %243 = vmatmul.f32.gmra.mxu0 %v242
      %v244 = vpop.f32.mrf.mxu0
      %v245 = vadd.f32 %v184, %v244
      %246 = vdwg.mxu0
      %247 = vmatpush.msra.mxu0 0.0
      %248 = vmatpush.msra.mxu0 0.0
      %249 = vmatpush.msra.mxu0 0.0
      %250 = vmatpush.msra.mxu0 0.0
      %251 = vmatpush.msra.mxu0 0.0
      %252 = vmatpush.msra.mxu0 0.0
      %253 = vmatpush.msra.mxu0 0.0
      %254 = vmatpush.msra.mxu0 0.0
      %v255 = vand.u32 %v91, 4294901760
      %v256 = vsub.f32 %v91, %v255
      %257 = vmatpush.msra.mxu0 %v256
      %v258 = vand.u32 %v90, 4294901760
      %v259 = vsub.f32 %v90, %v258
      %260 = vmatpush.msra.mxu0 %v259
      %v261 = vand.u32 %v89, 4294901760
      %v262 = vsub.f32 %v89, %v261
      %263 = vmatpush.msra.mxu0 %v262
      %v264 = vand.u32 %v88, 4294901760
      %v265 = vsub.f32 %v88, %v264
      %266 = vmatpush.msra.mxu0 %v265
      %v267 = vand.u32 %v87, 4294901760
      %v268 = vsub.f32 %v87, %v267
      %269 = vmatpush.msra.mxu0 %v268
      %v270 = vand.u32 %v86, 4294901760
      %v271 = vsub.f32 %v86, %v270
      %272 = vmatpush.msra.mxu0 %v271
      %v273 = vand.u32 %v85, 4294901760
      %v274 = vsub.f32 %v85, %v273
      %275 = vmatpush.msra.mxu0 %v274
      %v276 = vand.u32 %v84, 4294901760
      %v277 = vsub.f32 %v84, %v276
      %278 = vmatpush.msra.mxu0 %v277
      %v279 = vand.u32 %v151, 4294901760
      %v280 = vsub.f32 %v151, %v279
      %281 = vmatmul.f32.gmra.mxu0 %v280
      %v282 = vpop.f32.mrf.mxu0
      %v283 = vadd.f32 %v245, %v282
      %284 = vdwg.mxu0
      %285 = vmatpush.msra.mxu0 0.0
      %286 = vmatpush.msra.mxu0 0.0
      %287 = vmatpush.msra.mxu0 0.0
      %288 = vmatpush.msra.mxu0 0.0
      %289 = vmatpush.msra.mxu0 0.0
      %290 = vmatpush.msra.mxu0 0.0
      %291 = vmatpush.msra.mxu0 0.0
      %292 = vmatpush.msra.mxu0 0.0
      %v293 = vand.u32 %v91, 4294901760
      %294 = vmatpush.msra.mxu0 %v293
      %v295 = vand.u32 %v90, 4294901760
      %296 = vmatpush.msra.mxu0 %v295
      %v297 = vand.u32 %v89, 4294901760
      %298 = vmatpush.msra.mxu0 %v297
      %v299 = vand.u32 %v88, 4294901760
      %300 = vmatpush.msra.mxu0 %v299
      %v301 = vand.u32 %v87, 4294901760
      %302 = vmatpush.msra.mxu0 %v301
      %v303 = vand.u32 %v86, 4294901760
      %304 = vmatpush.msra.mxu0 %v303
      %v305 = vand.u32 %v85, 4294901760
      %306 = vmatpush.msra.mxu0 %v305
      %v307 = vand.u32 %v84, 4294901760
      %308 = vmatpush.msra.mxu0 %v307
      %v309 = vand.u32 %v151, 4294901760
      %v310 = vsub.f32 %v151, %v309
      %v311 = vand.u32 %v310, 4294901760
      %312 = vmatmul.f32.gmra.mxu0 %v311
      %v313 = vpop.f32.mrf.mxu0
      %v314 = vadd.f32 %v283, %v313
      %315 = vdwg.mxu0
      %316 = vmatpush.msra.mxu0 0.0
      %317 = vmatpush.msra.mxu0 0.0
      %318 = vmatpush.msra.mxu0 0.0
      %319 = vmatpush.msra.mxu0 0.0
      %320 = vmatpush.msra.mxu0 0.0
      %321 = vmatpush.msra.mxu0 0.0
      %322 = vmatpush.msra.mxu0 0.0
      %323 = vmatpush.msra.mxu0 0.0
      %v324 = vand.u32 %v91, 4294901760
      %v325 = vsub.f32 %v91, %v324
      %v326 = vand.u32 %v325, 4294901760
      %327 = vmatpush.msra.mxu0 %v326
      %v328 = vand.u32 %v90, 4294901760
      %v329 = vsub.f32 %v90, %v328
      %v330 = vand.u32 %v329, 4294901760
      %331 = vmatpush.msra.mxu0 %v330
      %v332 = vand.u32 %v89, 4294901760
      %v333 = vsub.f32 %v89, %v332
      %v334 = vand.u32 %v333, 4294901760
      %335 = vmatpush.msra.mxu0 %v334
      %v336 = vand.u32 %v88, 4294901760
      %v337 = vsub.f32 %v88, %v336
      %v338 = vand.u32 %v337, 4294901760
      %339 = vmatpush.msra.mxu0 %v338
      %v340 = vand.u32 %v87, 4294901760
      %v341 = vsub.f32 %v87, %v340
      %v342 = vand.u32 %v341, 4294901760
      %343 = vmatpush.msra.mxu0 %v342
      %v344 = vand.u32 %v86, 4294901760
      %v345 = vsub.f32 %v86, %v344
      %v346 = vand.u32 %v345, 4294901760
      %347 = vmatpush.msra.mxu0 %v346
      %v348 = vand.u32 %v85, 4294901760
      %v349 = vsub.f32 %v85, %v348
      %v350 = vand.u32 %v349, 4294901760
      %351 = vmatpush.msra.mxu0 %v350
      %v352 = vand.u32 %v84, 4294901760
      %v353 = vsub.f32 %v84, %v352
      %v354 = vand.u32 %v353, 4294901760
      %355 = vmatpush.msra.mxu0 %v354
      %v356 = vand.u32 %v151, 4294901760
      %357 = vmatmul.f32.gmra.mxu0 %v356
      %v358 = vpop.f32.mrf.mxu0
      %v359 = vadd.f32 %v314, %v358
      %360 = vdwg.mxu0
      %361 = vmatpush.msra.mxu0 0.0
      %362 = vmatpush.msra.mxu0 0.0
      %363 = vmatpush.msra.mxu0 0.0
      %364 = vmatpush.msra.mxu0 0.0
      %365 = vmatpush.msra.mxu0 0.0
      %366 = vmatpush.msra.mxu0 0.0
      %367 = vmatpush.msra.mxu0 0.0
      %368 = vmatpush.msra.mxu0 0.0
      %v369 = vand.u32 %v91, 4294901760
      %370 = vmatpush.msra.mxu0 %v369
      %v371 = vand.u32 %v90, 4294901760
      %372 = vmatpush.msra.mxu0 %v371
      %v373 = vand.u32 %v89, 4294901760
      %374 = vmatpush.msra.mxu0 %v373
      %v375 = vand.u32 %v88, 4294901760
      %376 = vmatpush.msra.mxu0 %v375
      %v377 = vand.u32 %v87, 4294901760
      %378 = vmatpush.msra.mxu0 %v377
      %v379 = vand.u32 %v86, 4294901760
      %380 = vmatpush.msra.mxu0 %v379
      %v381 = vand.u32 %v85, 4294901760
      %382 = vmatpush.msra.mxu0 %v381
      %v383 = vand.u32 %v84, 4294901760
      %384 = vmatpush.msra.mxu0 %v383
      %v385 = vand.u32 %v151, 4294901760
      %386 = vmatmul.f32.gmra.mxu0 %v385
      %v387 = vpop.f32.mrf.mxu0
      %v388 = vadd.f32 %v359, %v387
      %389 = vdwg.mxu0
      %v390 = vadd.f32 %v142, %v388
      %v391 = vxor.u32 %v390, 2147483648
      %v392 = vmul.f32 %v391, 1.442695
      %v393 = vpow.pop %v392
      %v394 = vadd.f32 %v393, 1.0
      %v395 = vrcp.pop %v394
      %v396 = vmul.f32 %v394, %v395
      %v397 = vsub.f32 1.0, %v396
      %v398 = vmul.f32 %v395, %v397
      %v399 = vadd.f32 %v395, %v398
      %vm400 = vweird.f32 %v394
      %vm401 = vweird.f32 %v395
      %vm402 = vmor %vm400, %vm401
      %v403 = vsel %vm402, %v395, %v399
      %v404 = vand.u32 2147483647, %v394
      %vm405 = vcmp.eq.f32.partialorder %v404, 8.507059e+37
      %v406 = vand.u32 %v394, 2147483648
      %v407 = vor.u32 1.1754944e-38, %v406
      %v408 = vsel %vm405, %v407, %v403
      %v409 = vmul.f32 1.0, %v408
      %v410 = vtanh.pop %v390
      %412 = vrot.lane.b32.xlu0 %v131, 32
      %v413 = vpop.permute.xlu0 %412
      %v415 = vmul.f32 %v409, %v413
      %417 = vrot.lane.b32.xlu0 %v410, 64
      %v418 = vpop.permute.xlu0 %417
      %v420 = vmul.f32 %v409, %v418
      %422 = vrot.lane.b32.xlu0 %v420, 32
      %v423 = vpop.permute.xlu0 %422
      %v425 = vadd.f32 %v415, %v423
      %v426 = vtanh.pop %v425
      %428 = vrot.lane.b32.xlu0 %v426, 64
      %v429 = vpop.permute.xlu0 %428
      %v431 = vmul.f32 %v409, %v429
      %433 = vrot.lane.b32.xlu0 %v431, 32
      %v434 = vpop.permute.xlu0 %433
      %437 = vrot.lane.b32.xlu0 %v130, 32
      %v438 = vpop.permute.xlu0 %437
      %v440 = vsel %vm147, %v434, %v438
      %v442 = vperm.slane %v100, 0
      %v445 = vsel %vm149, %v440, 0
      %447 = vmatpush.msra.mxu0 0.0
      %448 = vmatpush.msra.mxu0 0.0
      %449 = vmatpush.msra.mxu0 0.0
      %450 = vmatpush.msra.mxu0 0.0
      %451 = vmatpush.msra.mxu0 0.0
      %452 = vmatpush.msra.mxu0 0.0
      %453 = vmatpush.msra.mxu0 0.0
      %454 = vmatpush.msra.mxu0 0.0
      %v455 = vand.u32 %v99, 4294901760
      %456 = vmatpush.msra.mxu0 %v455
      %v457 = vand.u32 %v98, 4294901760
      %458 = vmatpush.msra.mxu0 %v457
      %v459 = vand.u32 %v97, 4294901760
      %460 = vmatpush.msra.mxu0 %v459
      %v461 = vand.u32 %v96, 4294901760
      %462 = vmatpush.msra.mxu0 %v461
      %v463 = vand.u32 %v95, 4294901760
      %464 = vmatpush.msra.mxu0 %v463
      %v465 = vand.u32 %v94, 4294901760
      %466 = vmatpush.msra.mxu0 %v465
      %v467 = vand.u32 %v93, 4294901760
      %468 = vmatpush.msra.mxu0 %v467
      %v469 = vand.u32 %v92, 4294901760
      %470 = vmatpush.msra.mxu0 %v469
      %v471 = vand.u32 %v445, 4294901760
      %v472 = vsub.f32 %v445, %v471
      %v473 = vand.u32 %v472, 4294901760
      %v474 = vsub.f32 %v472, %v473
      %v475 = vand.u32 %v474, 4294901760
      %476 = vmatmul.f32.gmra.mxu0 %v475
      %v477 = vpop.f32.mrf.mxu0
      %v478 = vadd.f32 %v442, %v477
      %479 = vdwg.mxu0
      %480 = vmatpush.msra.mxu0 0.0
      %481 = vmatpush.msra.mxu0 0.0
      %482 = vmatpush.msra.mxu0 0.0
      %483 = vmatpush.msra.mxu0 0.0
      %484 = vmatpush.msra.mxu0 0.0
      %485 = vmatpush.msra.mxu0 0.0
      %486 = vmatpush.msra.mxu0 0.0
      %487 = vmatpush.msra.mxu0 0.0
      %v488 = vand.u32 %v99, 4294901760
      %v489 = vsub.f32 %v99, %v488
      %v490 = vand.u32 %v489, 4294901760
      %v491 = vsub.f32 %v489, %v490
      %v492 = vand.u32 %v491, 4294901760
      %493 = vmatpush.msra.mxu0 %v492
      %v494 = vand.u32 %v98, 4294901760
      %v495 = vsub.f32 %v98, %v494
      %v496 = vand.u32 %v495, 4294901760
      %v497 = vsub.f32 %v495, %v496
      %v498 = vand.u32 %v497, 4294901760
      %499 = vmatpush.msra.mxu0 %v498
      %v500 = vand.u32 %v97, 4294901760
      %v501 = vsub.f32 %v97, %v500
      %v502 = vand.u32 %v501, 4294901760
      %v503 = vsub.f32 %v501, %v502
      %v504 = vand.u32 %v503, 4294901760
      %505 = vmatpush.msra.mxu0 %v504
      %v506 = vand.u32 %v96, 4294901760
      %v507 = vsub.f32 %v96, %v506
      %v508 = vand.u32 %v507, 4294901760
      %v509 = vsub.f32 %v507, %v508
      %v510 = vand.u32 %v509, 4294901760
      %511 = vmatpush.msra.mxu0 %v510
      %v512 = vand.u32 %v95, 4294901760
      %v513 = vsub.f32 %v95, %v512
      %v514 = vand.u32 %v513, 4294901760
      %v515 = vsub.f32 %v513, %v514
      %v516 = vand.u32 %v515, 4294901760
      %517 = vmatpush.msra.mxu0 %v516
      %v518 = vand.u32 %v94, 4294901760
      %v519 = vsub.f32 %v94, %v518
      %v520 = vand.u32 %v519, 4294901760
      %v521 = vsub.f32 %v519, %v520
      %v522 = vand.u32 %v521, 4294901760
      %523 = vmatpush.msra.mxu0 %v522
      %v524 = vand.u32 %v93, 4294901760
      %v525 = vsub.f32 %v93, %v524
      %v526 = vand.u32 %v525, 4294901760
      %v527 = vsub.f32 %v525, %v526
      %v528 = vand.u32 %v527, 4294901760
      %529 = vmatpush.msra.mxu0 %v528
      %v530 = vand.u32 %v92, 4294901760
      %v531 = vsub.f32 %v92, %v530
      %v532 = vand.u32 %v531, 4294901760
      %v533 = vsub.f32 %v531, %v532
      %v534 = vand.u32 %v533, 4294901760
      %535 = vmatpush.msra.mxu0 %v534
      %v536 = vand.u32 %v445, 4294901760
      %537 = vmatmul.f32.gmra.mxu0 %v536
      %v538 = vpop.f32.mrf.mxu0
      %v539 = vadd.f32 %v478, %v538
      %540 = vdwg.mxu0
      %541 = vmatpush.msra.mxu0 0.0
      %542 = vmatpush.msra.mxu0 0.0
      %543 = vmatpush.msra.mxu0 0.0
      %544 = vmatpush.msra.mxu0 0.0
      %545 = vmatpush.msra.mxu0 0.0
      %546 = vmatpush.msra.mxu0 0.0
      %547 = vmatpush.msra.mxu0 0.0
      %548 = vmatpush.msra.mxu0 0.0
      %v549 = vand.u32 %v99, 4294901760
      %v550 = vsub.f32 %v99, %v549
      %551 = vmatpush.msra.mxu0 %v550
      %v552 = vand.u32 %v98, 4294901760
      %v553 = vsub.f32 %v98, %v552
      %554 = vmatpush.msra.mxu0 %v553
      %v555 = vand.u32 %v97, 4294901760
      %v556 = vsub.f32 %v97, %v555
      %557 = vmatpush.msra.mxu0 %v556
      %v558 = vand.u32 %v96, 4294901760
      %v559 = vsub.f32 %v96, %v558
      %560 = vmatpush.msra.mxu0 %v559
      %v561 = vand.u32 %v95, 4294901760
      %v562 = vsub.f32 %v95, %v561
      %563 = vmatpush.msra.mxu0 %v562
      %v564 = vand.u32 %v94, 4294901760
      %v565 = vsub.f32 %v94, %v564
      %566 = vmatpush.msra.mxu0 %v565
      %v567 = vand.u32 %v93, 4294901760
      %v568 = vsub.f32 %v93, %v567
      %569 = vmatpush.msra.mxu0 %v568
      %v570 = vand.u32 %v92, 4294901760
      %v571 = vsub.f32 %v92, %v570
      %572 = vmatpush.msra.mxu0 %v571
      %v573 = vand.u32 %v445, 4294901760
      %v574 = vsub.f32 %v445, %v573
      %575 = vmatmul.f32.gmra.mxu0 %v574
      %v576 = vpop.f32.mrf.mxu0
      %v577 = vadd.f32 %v539, %v576
      %578 = vdwg.mxu0
      %579 = vmatpush.msra.mxu0 0.0
      %580 = vmatpush.msra.mxu0 0.0
      %581 = vmatpush.msra.mxu0 0.0
      %582 = vmatpush.msra.mxu0 0.0
      %583 = vmatpush.msra.mxu0 0.0
      %584 = vmatpush.msra.mxu0 0.0
      %585 = vmatpush.msra.mxu0 0.0
      %586 = vmatpush.msra.mxu0 0.0
      %v587 = vand.u32 %v99, 4294901760
      %588 = vmatpush.msra.mxu0 %v587
      %v589 = vand.u32 %v98, 4294901760
      %590 = vmatpush.msra.mxu0 %v589
      %v591 = vand.u32 %v97, 4294901760
      %592 = vmatpush.msra.mxu0 %v591
      %v593 = vand.u32 %v96, 4294901760
      %594 = vmatpush.msra.mxu0 %v593
      %v595 = vand.u32 %v95, 4294901760
      %596 = vmatpush.msra.mxu0 %v595
      %v597 = vand.u32 %v94, 4294901760
      %598 = vmatpush.msra.mxu0 %v597
      %v599 = vand.u32 %v93, 4294901760
      %600 = vmatpush.msra.mxu0 %v599
      %v601 = vand.u32 %v92, 4294901760
      %602 = vmatpush.msra.mxu0 %v601
      %v603 = vand.u32 %v445, 4294901760
      %v604 = vsub.f32 %v445, %v603
      %v605 = vand.u32 %v604, 4294901760
      %606 = vmatmul.f32.gmra.mxu0 %v605
      %v607 = vpop.f32.mrf.mxu0
      %v608 = vadd.f32 %v577, %v607
      %609 = vdwg.mxu0
      %610 = vmatpush.msra.mxu0 0.0
      %611 = vmatpush.msra.mxu0 0.0
      %612 = vmatpush.msra.mxu0 0.0
      %613 = vmatpush.msra.mxu0 0.0
      %614 = vmatpush.msra.mxu0 0.0
      %615 = vmatpush.msra.mxu0 0.0
      %616 = vmatpush.msra.mxu0 0.0
      %617 = vmatpush.msra.mxu0 0.0
      %v618 = vand.u32 %v99, 4294901760
      %v619 = vsub.f32 %v99, %v618
      %v620 = vand.u32 %v619, 4294901760
      %621 = vmatpush.msra.mxu0 %v620
      %v622 = vand.u32 %v98, 4294901760
      %v623 = vsub.f32 %v98, %v622
      %v624 = vand.u32 %v623, 4294901760
      %625 = vmatpush.msra.mxu0 %v624
      %v626 = vand.u32 %v97, 4294901760
      %v627 = vsub.f32 %v97, %v626
      %v628 = vand.u32 %v627, 4294901760
      %629 = vmatpush.msra.mxu0 %v628
      %v630 = vand.u32 %v96, 4294901760
      %v631 = vsub.f32 %v96, %v630
      %v632 = vand.u32 %v631, 4294901760
      %633 = vmatpush.msra.mxu0 %v632
      %v634 = vand.u32 %v95, 4294901760
      %v635 = vsub.f32 %v95, %v634
      %v636 = vand.u32 %v635, 4294901760
      %637 = vmatpush.msra.mxu0 %v636
      %v638 = vand.u32 %v94, 4294901760
      %v639 = vsub.f32 %v94, %v638
      %v640 = vand.u32 %v639, 4294901760
      %641 = vmatpush.msra.mxu0 %v640
      %v642 = vand.u32 %v93, 4294901760
      %v643 = vsub.f32 %v93, %v642
      %v644 = vand.u32 %v643, 4294901760
      %645 = vmatpush.msra.mxu0 %v644
      %v646 = vand.u32 %v92, 4294901760
      %v647 = vsub.f32 %v92, %v646
      %v648 = vand.u32 %v647, 4294901760
      %649 = vmatpush.msra.mxu0 %v648
      %v650 = vand.u32 %v445, 4294901760
      %651 = vmatmul.f32.gmra.mxu0 %v650
      %v652 = vpop.f32.mrf.mxu0
      %v653 = vadd.f32 %v608, %v652
      %654 = vdwg.mxu0
      %655 = vmatpush.msra.mxu0 0.0
      %656 = vmatpush.msra.mxu0 0.0
      %657 = vmatpush.msra.mxu0 0.0
      %658 = vmatpush.msra.mxu0 0.0
      %659 = vmatpush.msra.mxu0 0.0
      %660 = vmatpush.msra.mxu0 0.0
      %661 = vmatpush.msra.mxu0 0.0
      %662 = vmatpush.msra.mxu0 0.0
      %v663 = vand.u32 %v99, 4294901760
      %664 = vmatpush.msra.mxu0 %v663
      %v665 = vand.u32 %v98, 4294901760
      %666 = vmatpush.msra.mxu0 %v665
      %v667 = vand.u32 %v97, 4294901760
      %668 = vmatpush.msra.mxu0 %v667
      %v669 = vand.u32 %v96, 4294901760
      %670 = vmatpush.msra.mxu0 %v669
      %v671 = vand.u32 %v95, 4294901760
      %672 = vmatpush.msra.mxu0 %v671
      %v673 = vand.u32 %v94, 4294901760
      %674 = vmatpush.msra.mxu0 %v673
      %v675 = vand.u32 %v93, 4294901760
      %676 = vmatpush.msra.mxu0 %v675
      %v677 = vand.u32 %v92, 4294901760
      %678 = vmatpush.msra.mxu0 %v677
      %v679 = vand.u32 %v445, 4294901760
      %680 = vmatmul.f32.gmra.mxu0 %v679
      %v681 = vpop.f32.mrf.mxu0
      %v682 = vadd.f32 %v653, %v681
      %683 = vdwg.mxu0
      %v684 = vxor.u32 %v682, 2147483648
      %v685 = vmul.f32 %v684, 1.442695
      %v686 = vpow.pop %v685
      %v687 = vadd.f32 %v686, 1.0
      %v688 = vrcp.pop %v687
      %v689 = vmul.f32 %v687, %v688
      %v690 = vsub.f32 1.0, %v689
      %v691 = vmul.f32 %v688, %v690
      %v692 = vadd.f32 %v688, %v691
      %vm693 = vweird.f32 %v687
      %vm694 = vweird.f32 %v688
      %vm695 = vmor %vm693, %vm694
      %v696 = vsel %vm695, %v688, %v692
      %v697 = vand.u32 2147483647, %v687
      %vm698 = vcmp.eq.f32.partialorder %v697, 8.507059e+37
      %v699 = vand.u32 %v687, 2147483648
      %v700 = vor.u32 1.1754944e-38, %v699
      %v701 = vsel %vm698, %v700, %v696
      %v702 = vmul.f32 1.0, %v701
      %v703 = vtanh.pop %v682
      %705 = vrot.lane.b32.xlu0 %v132, 32
      %v706 = vpop.permute.xlu0 %705
      %v708 = vmul.f32 %v702, %v706
      %710 = vrot.lane.b32.xlu0 %v703, 64
      %v711 = vpop.permute.xlu0 %710
      %v713 = vmul.f32 %v702, %v711
      %715 = vrot.lane.b32.xlu0 %v713, 32
      %v716 = vpop.permute.xlu0 %715
      %v718 = vadd.f32 %v708, %v716
      %v719 = vtanh.pop %v718
      %721 = vrot.lane.b32.xlu0 %v719, 64
      %v722 = vpop.permute.xlu0 %721
      %v724 = vmul.f32 %v702, %v722
      %726 = vrot.lane.b32.xlu0 %v724, 32
      %v727 = vpop.permute.xlu0 %726
      %v728 = vsel %vm147, %v727, 0
      %730 = vmatpush.msra.mxu0 0.0
      %731 = vmatpush.msra.mxu0 0.0
      %732 = vmatpush.msra.mxu0 0.0
      %733 = vmatpush.msra.mxu0 0.0
      %734 = vmatpush.msra.mxu0 0.0
      %735 = vmatpush.msra.mxu0 0.0
      %736 = vmatpush.msra.mxu0 0.0
      %737 = vmatpush.msra.mxu0 0.0
      %738 = vmatpush.msra.mxu0 0.0
      %739 = vmatpush.msra.mxu0 0.0
      %740 = vmatpush.msra.mxu0 0.0
      %741 = vmatpush.msra.mxu0 0.0
      %v742 = vand.u32 %v104, 4294901760
      %743 = vmatpush.msra.mxu0 %v742
      %v744 = vand.u32 %v103, 4294901760
      %745 = vmatpush.msra.mxu0 %v744
      %v746 = vand.u32 %v102, 4294901760
      %747 = vmatpush.msra.mxu0 %v746
      %v748 = vand.u32 %v101, 4294901760
      %749 = vmatpush.msra.mxu0 %v748
      %v750 = vand.u32 %v728, 4294901760
      %v751 = vsub.f32 %v728, %v750
      %v752 = vand.u32 %v751, 4294901760
      %v753 = vsub.f32 %v751, %v752
      %v754 = vand.u32 %v753, 4294901760
      %755 = vmatmul.f32.gmra.mxu0 %v754
      %v756 = vpop.f32.mrf.mxu0
      %v757 = vadd.f32 0.0, %v756
      %758 = vdwg.mxu0
      %759 = vmatpush.msra.mxu0 0.0
      %760 = vmatpush.msra.mxu0 0.0
      %761 = vmatpush.msra.mxu0 0.0
      %762 = vmatpush.msra.mxu0 0.0
      %763 = vmatpush.msra.mxu0 0.0
      %764 = vmatpush.msra.mxu0 0.0
      %765 = vmatpush.msra.mxu0 0.0
      %766 = vmatpush.msra.mxu0 0.0
      %767 = vmatpush.msra.mxu0 0.0
      %768 = vmatpush.msra.mxu0 0.0
      %769 = vmatpush.msra.mxu0 0.0
      %770 = vmatpush.msra.mxu0 0.0
      %v771 = vand.u32 %v104, 4294901760
      %v772 = vsub.f32 %v104, %v771
      %v773 = vand.u32 %v772, 4294901760
      %v774 = vsub.f32 %v772, %v773
      %v775 = vand.u32 %v774, 4294901760
      %776 = vmatpush.msra.mxu0 %v775
      %v777 = vand.u32 %v103, 4294901760
      %v778 = vsub.f32 %v103, %v777
      %v779 = vand.u32 %v778, 4294901760
      %v780 = vsub.f32 %v778, %v779
      %v781 = vand.u32 %v780, 4294901760
      %782 = vmatpush.msra.mxu0 %v781
      %v783 = vand.u32 %v102, 4294901760
      %v784 = vsub.f32 %v102, %v783
      %v785 = vand.u32 %v784, 4294901760
      %v786 = vsub.f32 %v784, %v785
      %v787 = vand.u32 %v786, 4294901760
      %788 = vmatpush.msra.mxu0 %v787
      %v789 = vand.u32 %v101, 4294901760
      %v790 = vsub.f32 %v101, %v789
      %v791 = vand.u32 %v790, 4294901760
      %v792 = vsub.f32 %v790, %v791
      %v793 = vand.u32 %v792, 4294901760
      %794 = vmatpush.msra.mxu0 %v793
      %v795 = vand.u32 %v728, 4294901760
      %796 = vmatmul.f32.gmra.mxu0 %v795
      %v797 = vpop.f32.mrf.mxu0
      %v798 = vadd.f32 %v757, %v797
      %799 = vdwg.mxu0
      %800 = vmatpush.msra.mxu0 0.0
      %801 = vmatpush.msra.mxu0 0.0
      %802 = vmatpush.msra.mxu0 0.0
      %803 = vmatpush.msra.mxu0 0.0
      %804 = vmatpush.msra.mxu0 0.0
      %805 = vmatpush.msra.mxu0 0.0
      %806 = vmatpush.msra.mxu0 0.0
      %807 = vmatpush.msra.mxu0 0.0
      %808 = vmatpush.msra.mxu0 0.0
      %809 = vmatpush.msra.mxu0 0.0
      %810 = vmatpush.msra.mxu0 0.0
      %811 = vmatpush.msra.mxu0 0.0
      %v812 = vand.u32 %v104, 4294901760
      %v813 = vsub.f32 %v104, %v812
      %814 = vmatpush.msra.mxu0 %v813
      %v815 = vand.u32 %v103, 4294901760
      %v816 = vsub.f32 %v103, %v815
      %817 = vmatpush.msra.mxu0 %v816
      %v818 = vand.u32 %v102, 4294901760
      %v819 = vsub.f32 %v102, %v818
      %820 = vmatpush.msra.mxu0 %v819
      %v821 = vand.u32 %v101, 4294901760
      %v822 = vsub.f32 %v101, %v821
      %823 = vmatpush.msra.mxu0 %v822
      %v824 = vand.u32 %v728, 4294901760
      %v825 = vsub.f32 %v728, %v824
      %826 = vmatmul.f32.gmra.mxu0 %v825
      %v827 = vpop.f32.mrf.mxu0
      %v828 = vadd.f32 %v798, %v827
      %829 = vdwg.mxu0
      %830 = vmatpush.msra.mxu0 0.0
      %831 = vmatpush.msra.mxu0 0.0
      %832 = vmatpush.msra.mxu0 0.0
      %833 = vmatpush.msra.mxu0 0.0
      %834 = vmatpush.msra.mxu0 0.0
      %835 = vmatpush.msra.mxu0 0.0
      %836 = vmatpush.msra.mxu0 0.0
      %837 = vmatpush.msra.mxu0 0.0
      %838 = vmatpush.msra.mxu0 0.0
      %839 = vmatpush.msra.mxu0 0.0
      %840 = vmatpush.msra.mxu0 0.0
      %841 = vmatpush.msra.mxu0 0.0
      %v842 = vand.u32 %v104, 4294901760
      %843 = vmatpush.msra.mxu0 %v842
      %v844 = vand.u32 %v103, 4294901760
      %845 = vmatpush.msra.mxu0 %v844
      %v846 = vand.u32 %v102, 4294901760
      %847 = vmatpush.msra.mxu0 %v846
      %v848 = vand.u32 %v101, 4294901760
      %849 = vmatpush.msra.mxu0 %v848
      %v850 = vand.u32 %v728, 4294901760
      %v851 = vsub.f32 %v728, %v850
      %v852 = vand.u32 %v851, 4294901760
      %853 = vmatmul.f32.gmra.mxu0 %v852
      %v854 = vpop.f32.mrf.mxu0
      %v855 = vadd.f32 %v828, %v854
      %856 = vdwg.mxu0
      %857 = vmatpush.msra.mxu0 0.0
      %858 = vmatpush.msra.mxu0 0.0
      %859 = vmatpush.msra.mxu0 0.0
      %860 = vmatpush.msra.mxu0 0.0
      %861 = vmatpush.msra.mxu0 0.0
      %862 = vmatpush.msra.mxu0 0.0
      %863 = vmatpush.msra.mxu0 0.0
      %864 = vmatpush.msra.mxu0 0.0
      %865 = vmatpush.msra.mxu0 0.0
      %866 = vmatpush.msra.mxu0 0.0
      %867 = vmatpush.msra.mxu0 0.0
      %868 = vmatpush.msra.mxu0 0.0
      %v869 = vand.u32 %v104, 4294901760
      %v870 = vsub.f32 %v104, %v869
      %v871 = vand.u32 %v870, 4294901760
      %872 = vmatpush.msra.mxu0 %v871
      %v873 = vand.u32 %v103, 4294901760
      %v874 = vsub.f32 %v103, %v873
      %v875 = vand.u32 %v874, 4294901760
      %876 = vmatpush.msra.mxu0 %v875
      %v877 = vand.u32 %v102, 4294901760
      %v878 = vsub.f32 %v102, %v877
      %v879 = vand.u32 %v878, 4294901760
      %880 = vmatpush.msra.mxu0 %v879
      %v881 = vand.u32 %v101, 4294901760
      %v882 = vsub.f32 %v101, %v881
      %v883 = vand.u32 %v882, 4294901760
      %884 = vmatpush.msra.mxu0 %v883
      %v885 = vand.u32 %v728, 4294901760
      %886 = vmatmul.f32.gmra.mxu0 %v885
      %v887 = vpop.f32.mrf.mxu0
      %v888 = vadd.f32 %v855, %v887
      %889 = vdwg.mxu0
      %890 = vmatpush.msra.mxu0 0.0
      %891 = vmatpush.msra.mxu0 0.0
      %892 = vmatpush.msra.mxu0 0.0
      %893 = vmatpush.msra.mxu0 0.0
      %894 = vmatpush.msra.mxu0 0.0
      %895 = vmatpush.msra.mxu0 0.0
      %896 = vmatpush.msra.mxu0 0.0
      %897 = vmatpush.msra.mxu0 0.0
      %898 = vmatpush.msra.mxu0 0.0
      %899 = vmatpush.msra.mxu0 0.0
      %900 = vmatpush.msra.mxu0 0.0
      %901 = vmatpush.msra.mxu0 0.0
      %v902 = vand.u32 %v104, 4294901760
      %903 = vmatpush.msra.mxu0 %v902
      %v904 = vand.u32 %v103, 4294901760
      %905 = vmatpush.msra.mxu0 %v904
      %v906 = vand.u32 %v102, 4294901760
      %907 = vmatpush.msra.mxu0 %v906
      %v908 = vand.u32 %v101, 4294901760
      %909 = vmatpush.msra.mxu0 %v908
      %v910 = vand.u32 %v728, 4294901760
      %911 = vmatmul.f32.gmra.mxu0 %v910
      %v912 = vpop.f32.mrf.mxu0
      %v913 = vadd.f32 %v888, %v912
      %914 = vdwg.mxu0
      %v916 = vrot.slane %v913, 1
      %v917 = vperm.slane %v913, 0
      %v918 = vperm.slane %v916, 0
      %v921 = vadd.f32 %v917, %v76
      %v922 = vadd.f32 %v918, %v77
      %924 = vset.pattern.permute.xlu0 0
      %925 = vperm.xlu0 %924, %v134
      %v926 = vpop.permute.xlu0 %925
      %929 = vset.pattern.permute.xlu0 0
      %930 = vperm.xlu0 %929, %v135
      %v931 = vpop.permute.xlu0 %930
      %v934 = vperm.slane %v106, 0
      %v936 = vmul.f32 %v926, %v934
      %v937 = vmul.f32 %v931, %v934
      %v938 = vadd.f32 %v921, %v936
      %v939 = vadd.f32 %v922, %v937
      %v940 = vtanh.pop %v938
      %v941 = vtanh.pop %v939
      %v943 = vperm.slane %v105, 0
      %v945 = vmul.f32 %v940, %v943
      %v946 = vmul.f32 %v941, %v943
      %v947 = vsel %vm147, %v945, 0.0
      %948 = vadd.xlane.f32.xlu0 %v947
      %v949 = vpop.xlane.xlu0 %948
      %v950 = vsel %vm147, %v946, 0.0
      %951 = vadd.xlane.f32.xlu0 %v950
      %v952 = vpop.xlane.xlu0 %951
      %v954 = vperm.slane %v82, 0
      %v955 = vlaneseq
      %v956 = vshrl.u32 %v955, 7
      %958 = vset.pattern.permute.xlu0 %v956
      %959 = vperm.xlu0 %958, %v954
      %v960 = vpop.permute.xlu0 %959
      %v961 = vperm.slane %v82, 1
      %v962 = vlaneseq
      %v963 = vshrl.u32 %v962, 7
      %965 = vset.pattern.permute.xlu0 %v963
      %966 = vperm.xlu0 %965, %v961
      %v967 = vpop.permute.xlu0 %966
      %v970 = vadd.f32 %v949, %v960
      %v971 = vadd.f32 %v952, %v967
      %974 = vset.pattern.permute.xlu0 0
      %975 = vperm.xlu0 %974, %v970
      %v976 = vpop.permute.xlu0 %975
      %977 = vset.pattern.permute.xlu0 0
      %978 = vperm.xlu0 %977, %v971
      %v979 = vpop.permute.xlu0 %978
      %v980 = vlaneseq
      %v981 = vand.u32 %v980, 127
      %v982 = vperm.slane %v976, %v981
      %v983 = vperm.slane %v979, %v981
      %vm984 = vcmask 1041409
      %v985 = vsel %vm984, %v983, %v982
      %vm987 = vcmask 58368
      %v988 = vsel %vm987, %v985, -inf
      %989 = vmax.xlane.f32.xlu0 %v988
      %v990 = vpop.xlane.xlu0 %989
      %v992 = vperm.slane %v990, 0
      %v993 = vperm.slane %v990, 1
      %v996 = vsub.f32 %v970, %v992
      %v997 = vsub.f32 %v971, %v993
      %v998 = vmul.f32 %v996, 1.442695
      %v999 = vpow.pop %v998
      %v1000 = vmul.f32 %v997, 1.442695
      %v1001 = vpow.pop %v1000
      %1004 = vset.pattern.permute.xlu0 0
      %1005 = vperm.xlu0 %1004, %v999
      %v1006 = vpop.permute.xlu0 %1005
      %1007 = vset.pattern.permute.xlu0 0
      %1008 = vperm.xlu0 %1007, %v1001
      %v1009 = vpop.permute.xlu0 %1008
      %v1010 = vperm.slane %v1006, %v981
      %v1011 = vperm.slane %v1009, %v981
      %v1012 = vsel %vm984, %v1011, %v1010
      %v1014 = vsel %vm987, %v1012, 0.0
      %1015 = vadd.xlane.f32.xlu0 %v1014
      %v1016 = vpop.xlane.xlu0 %1015
      %v1018 = vperm.slane %v1016, 0
      %v1019 = vperm.slane %v1016, 1
      %v1022 = vrcp.pop %v1018
      %v1023 = vmul.f32 %v1018, %v1022
      %v1024 = vsub.f32 1.0, %v1023
      %v1025 = vmul.f32 %v1022, %v1024
      %v1026 = vadd.f32 %v1022, %v1025
      %vm1027 = vweird.f32 %v1018
      %vm1028 = vweird.f32 %v1022
      %vm1029 = vmor %vm1027, %vm1028
      %v1030 = vsel %vm1029, %v1022, %v1026
      %v1031 = vand.u32 2147483647, %v1018
      %vm1032 = vcmp.eq.f32.partialorder %v1031, 8.507059e+37
      %v1033 = vand.u32 %v1018, 2147483648
      %v1034 = vor.u32 1.1754944e-38, %v1033
      %v1035 = vsel %vm1032, %v1034, %v1030
      %v1036 = vmul.f32 %v999, %v1035
      %v1037 = vrcp.pop %v1019
      %v1038 = vmul.f32 %v1019, %v1037
      %v1039 = vsub.f32 1.0, %v1038
      %v1040 = vmul.f32 %v1037, %v1039
      %v1041 = vadd.f32 %v1037, %v1040
      %vm1042 = vweird.f32 %v1019
      %vm1043 = vweird.f32 %v1037
      %vm1044 = vmor %vm1042, %vm1043
      %v1045 = vsel %vm1044, %v1037, %v1041
      %v1046 = vand.u32 2147483647, %v1019
      %vm1047 = vcmp.eq.f32.partialorder %v1046, 8.507059e+37
      %v1048 = vand.u32 %v1019, 2147483648
      %v1049 = vor.u32 1.1754944e-38, %v1048
      %v1050 = vsel %vm1047, %v1049, %v1045
      %v1051 = vmul.f32 %v1001, %v1050
      %1053 = vset.pattern.permute.xlu0 0
      %1054 = vperm.xlu0 %1053, %v1036
      %v1055 = vpop.permute.xlu0 %1054
      %v1056 = vperm.slane %v1055, %v981
      %vm1057 = vcmask 64512
      %v1058 = vsel %vm1057, %v1056, 0
      %1060 = vmatpush.msra.mxu0 0.0
      %1061 = vmatpush.msra.mxu0 0.0
      %1062 = vmatpush.msra.mxu0 0.0
      %1063 = vmatpush.msra.mxu0 0.0
      %1064 = vmatpush.msra.mxu0 0.0
      %1065 = vmatpush.msra.mxu0 0.0
      %1066 = vmatpush.msra.mxu0 0.0
      %1067 = vmatpush.msra.mxu0 0.0
      %1068 = vmatpush.msra.mxu0 0.0
      %1069 = vmatpush.msra.mxu0 0.0
      %1070 = vmatpush.msra.mxu0 0.0
      %1071 = vmatpush.msra.mxu0 0.0
      %1072 = vmatpush.msra.mxu0 0.0
      %1073 = vmatpush.msra.mxu0 0.0
      %1074 = vmatpush.msra.mxu0 0.0
      %v1075 = vand.u32 %v70, 4294901760
      %1076 = vmatpush.msra.mxu0 %v1075
      %v1077 = vand.u32 %v1058, 4294901760
      %v1078 = vsub.f32 %v1058, %v1077
      %v1079 = vand.u32 %v1078, 4294901760
      %v1080 = vsub.f32 %v1078, %v1079
      %v1081 = vand.u32 %v1080, 4294901760
      %1082 = vmatmul.f32.gmra.mxu0 %v1081
      %v1083 = vpop.f32.mrf.mxu0
      %v1084 = vadd.f32 0.0, %v1083
      %1085 = vdwg.mxu0
      %1086 = vmatpush.msra.mxu0 0.0
      %1087 = vmatpush.msra.mxu0 0.0
      %1088 = vmatpush.msra.mxu0 0.0
      %1089 = vmatpush.msra.mxu0 0.0
      %1090 = vmatpush.msra.mxu0 0.0
      %1091 = vmatpush.msra.mxu0 0.0
      %1092 = vmatpush.msra.mxu0 0.0
      %1093 = vmatpush.msra.mxu0 0.0
      %1094 = vmatpush.msra.mxu0 0.0
      %1095 = vmatpush.msra.mxu0 0.0
      %1096 = vmatpush.msra.mxu0 0.0
      %1097 = vmatpush.msra.mxu0 0.0
      %1098 = vmatpush.msra.mxu0 0.0
      %1099 = vmatpush.msra.mxu0 0.0
      %1100 = vmatpush.msra.mxu0 0.0
      %v1101 = vand.u32 %v70, 4294901760
      %v1102 = vsub.f32 %v70, %v1101
      %v1103 = vand.u32 %v1102, 4294901760
      %v1104 = vsub.f32 %v1102, %v1103
      %v1105 = vand.u32 %v1104, 4294901760
      %1106 = vmatpush.msra.mxu0 %v1105
      %v1107 = vand.u32 %v1058, 4294901760
      %1108 = vmatmul.f32.gmra.mxu0 %v1107
      %v1109 = vpop.f32.mrf.mxu0
      %v1110 = vadd.f32 %v1084, %v1109
      %1111 = vdwg.mxu0
      %1112 = vmatpush.msra.mxu0 0.0
      %1113 = vmatpush.msra.mxu0 0.0
      %1114 = vmatpush.msra.mxu0 0.0
      %1115 = vmatpush.msra.mxu0 0.0
      %1116 = vmatpush.msra.mxu0 0.0
      %1117 = vmatpush.msra.mxu0 0.0
      %1118 = vmatpush.msra.mxu0 0.0
      %1119 = vmatpush.msra.mxu0 0.0
      %1120 = vmatpush.msra.mxu0 0.0
      %1121 = vmatpush.msra.mxu0 0.0
      %1122 = vmatpush.msra.mxu0 0.0
      %1123 = vmatpush.msra.mxu0 0.0
      %1124 = vmatpush.msra.mxu0 0.0
      %1125 = vmatpush.msra.mxu0 0.0
      %1126 = vmatpush.msra.mxu0 0.0
      %v1127 = vand.u32 %v70, 4294901760
      %v1128 = vsub.f32 %v70, %v1127
      %1129 = vmatpush.msra.mxu0 %v1128
      %v1130 = vand.u32 %v1058, 4294901760
      %v1131 = vsub.f32 %v1058, %v1130
      %1132 = vmatmul.f32.gmra.mxu0 %v1131
      %v1133 = vpop.f32.mrf.mxu0
      %v1134 = vadd.f32 %v1110, %v1133
      %1135 = vdwg.mxu0
      %1136 = vmatpush.msra.mxu0 0.0
      %1137 = vmatpush.msra.mxu0 0.0
      %1138 = vmatpush.msra.mxu0 0.0
      %1139 = vmatpush.msra.mxu0 0.0
      %1140 = vmatpush.msra.mxu0 0.0
      %1141 = vmatpush.msra.mxu0 0.0
      %1142 = vmatpush.msra.mxu0 0.0
      %1143 = vmatpush.msra.mxu0 0.0
      %1144 = vmatpush.msra.mxu0 0.0
      %1145 = vmatpush.msra.mxu0 0.0
      %1146 = vmatpush.msra.mxu0 0.0
      %1147 = vmatpush.msra.mxu0 0.0
      %1148 = vmatpush.msra.mxu0 0.0
      %1149 = vmatpush.msra.mxu0 0.0
      %1150 = vmatpush.msra.mxu0 0.0
      %v1151 = vand.u32 %v70, 4294901760
      %1152 = vmatpush.msra.mxu0 %v1151
      %v1153 = vand.u32 %v1058, 4294901760
      %v1154 = vsub.f32 %v1058, %v1153
      %v1155 = vand.u32 %v1154, 4294901760
      %1156 = vmatmul.f32.gmra.mxu0 %v1155
      %v1157 = vpop.f32.mrf.mxu0
      %v1158 = vadd.f32 %v1134, %v1157
      %1159 = vdwg.mxu0
      %1160 = vmatpush.msra.mxu0 0.0
      %1161 = vmatpush.msra.mxu0 0.0
      %1162 = vmatpush.msra.mxu0 0.0
      %1163 = vmatpush.msra.mxu0 0.0
      %1164 = vmatpush.msra.mxu0 0.0
      %1165 = vmatpush.msra.mxu0 0.0
      %1166 = vmatpush.msra.mxu0 0.0
      %1167 = vmatpush.msra.mxu0 0.0
      %1168 = vmatpush.msra.mxu0 0.0
      %1169 = vmatpush.msra.mxu0 0.0
      %1170 = vmatpush.msra.mxu0 0.0
      %1171 = vmatpush.msra.mxu0 0.0
      %1172 = vmatpush.msra.mxu0 0.0
      %1173 = vmatpush.msra.mxu0 0.0
      %1174 = vmatpush.msra.mxu0 0.0
      %v1175 = vand.u32 %v70, 4294901760
      %v1176 = vsub.f32 %v70, %v1175
      %v1177 = vand.u32 %v1176, 4294901760
      %1178 = vmatpush.msra.mxu0 %v1177
      %v1179 = vand.u32 %v1058, 4294901760
      %1180 = vmatmul.f32.gmra.mxu0 %v1179
      %v1181 = vpop.f32.mrf.mxu0
      %v1182 = vadd.f32 %v1158, %v1181
      %1183 = vdwg.mxu0
      %1184 = vmatpush.msra.mxu0 0.0
      %1185 = vmatpush.msra.mxu0 0.0
      %1186 = vmatpush.msra.mxu0 0.0
      %1187 = vmatpush.msra.mxu0 0.0
      %1188 = vmatpush.msra.mxu0 0.0
      %1189 = vmatpush.msra.mxu0 0.0
      %1190 = vmatpush.msra.mxu0 0.0
      %1191 = vmatpush.msra.mxu0 0.0
      %1192 = vmatpush.msra.mxu0 0.0
      %1193 = vmatpush.msra.mxu0 0.0
      %1194 = vmatpush.msra.mxu0 0.0
      %1195 = vmatpush.msra.mxu0 0.0
      %1196 = vmatpush.msra.mxu0 0.0
      %1197 = vmatpush.msra.mxu0 0.0
      %1198 = vmatpush.msra.mxu0 0.0
      %v1199 = vand.u32 %v70, 4294901760
      %1200 = vmatpush.msra.mxu0 %v1199
      %v1201 = vand.u32 %v1058, 4294901760
      %1202 = vmatmul.f32.gmra.mxu0 %v1201
      %v1203 = vpop.f32.mrf.mxu0
      %v1204 = vadd.f32 %v1182, %v1203
      %1205 = vdwg.mxu0
      %1207 = vset.pattern.permute.xlu0 0
      %1208 = vperm.xlu0 %1207, %v1051
      %v1209 = vpop.permute.xlu0 %1208
      %v1210 = vperm.slane %v1209, %v981
      %v1211 = vsel %vm1057, %v1210, 0
      %1213 = vmatpush.msra.mxu0 0.0
      %1214 = vmatpush.msra.mxu0 0.0
      %1215 = vmatpush.msra.mxu0 0.0
      %1216 = vmatpush.msra.mxu0 0.0
      %1217 = vmatpush.msra.mxu0 0.0
      %1218 = vmatpush.msra.mxu0 0.0
      %1219 = vmatpush.msra.mxu0 0.0
      %1220 = vmatpush.msra.mxu0 0.0
      %1221 = vmatpush.msra.mxu0 0.0
      %1222 = vmatpush.msra.mxu0 0.0
      %1223 = vmatpush.msra.mxu0 0.0
      %1224 = vmatpush.msra.mxu0 0.0
      %1225 = vmatpush.msra.mxu0 0.0
      %1226 = vmatpush.msra.mxu0 0.0
      %1227 = vmatpush.msra.mxu0 0.0
      %v1228 = vand.u32 %v71, 4294901760
      %1229 = vmatpush.msra.mxu0 %v1228
      %v1230 = vand.u32 %v1211, 4294901760
      %v1231 = vsub.f32 %v1211, %v1230
      %v1232 = vand.u32 %v1231, 4294901760
      %v1233 = vsub.f32 %v1231, %v1232
      %v1234 = vand.u32 %v1233, 4294901760
      %1235 = vmatmul.f32.gmra.mxu0 %v1234
      %v1236 = vpop.f32.mrf.mxu0
      %v1237 = vadd.f32 0.0, %v1236
      %1238 = vdwg.mxu0
      %1239 = vmatpush.msra.mxu0 0.0
      %1240 = vmatpush.msra.mxu0 0.0
      %1241 = vmatpush.msra.mxu0 0.0
      %1242 = vmatpush.msra.mxu0 0.0
      %1243 = vmatpush.msra.mxu0 0.0
      %1244 = vmatpush.msra.mxu0 0.0
      %1245 = vmatpush.msra.mxu0 0.0
      %1246 = vmatpush.msra.mxu0 0.0
      %1247 = vmatpush.msra.mxu0 0.0
      %1248 = vmatpush.msra.mxu0 0.0
      %1249 = vmatpush.msra.mxu0 0.0
      %1250 = vmatpush.msra.mxu0 0.0
      %1251 = vmatpush.msra.mxu0 0.0
      %1252 = vmatpush.msra.mxu0 0.0
      %1253 = vmatpush.msra.mxu0 0.0
      %v1254 = vand.u32 %v71, 4294901760
      %v1255 = vsub.f32 %v71, %v1254
      %v1256 = vand.u32 %v1255, 4294901760
      %v1257 = vsub.f32 %v1255, %v1256
      %v1258 = vand.u32 %v1257, 4294901760
      %1259 = vmatpush.msra.mxu0 %v1258
      %v1260 = vand.u32 %v1211, 4294901760
      %1261 = vmatmul.f32.gmra.mxu0 %v1260
      %v1262 = vpop.f32.mrf.mxu0
      %v1263 = vadd.f32 %v1237, %v1262
      %1264 = vdwg.mxu0
      %1265 = vmatpush.msra.mxu0 0.0
      %1266 = vmatpush.msra.mxu0 0.0
      %1267 = vmatpush.msra.mxu0 0.0
      %1268 = vmatpush.msra.mxu0 0.0
      %1269 = vmatpush.msra.mxu0 0.0
      %1270 = vmatpush.msra.mxu0 0.0
      %1271 = vmatpush.msra.mxu0 0.0
      %1272 = vmatpush.msra.mxu0 0.0
      %1273 = vmatpush.msra.mxu0 0.0
      %1274 = vmatpush.msra.mxu0 0.0
      %1275 = vmatpush.msra.mxu0 0.0
      %1276 = vmatpush.msra.mxu0 0.0
      %1277 = vmatpush.msra.mxu0 0.0
      %1278 = vmatpush.msra.mxu0 0.0
      %1279 = vmatpush.msra.mxu0 0.0
      %v1280 = vand.u32 %v71, 4294901760
      %v1281 = vsub.f32 %v71, %v1280
      %1282 = vmatpush.msra.mxu0 %v1281
      %v1283 = vand.u32 %v1211, 4294901760
      %v1284 = vsub.f32 %v1211, %v1283
      %1285 = vmatmul.f32.gmra.mxu0 %v1284
      %v1286 = vpop.f32.mrf.mxu0
      %v1287 = vadd.f32 %v1263, %v1286
      %1288 = vdwg.mxu0
      %1289 = vmatpush.msra.mxu0 0.0
      %1290 = vmatpush.msra.mxu0 0.0
      %1291 = vmatpush.msra.mxu0 0.0
      %1292 = vmatpush.msra.mxu0 0.0
      %1293 = vmatpush.msra.mxu0 0.0
      %1294 = vmatpush.msra.mxu0 0.0
      %1295 = vmatpush.msra.mxu0 0.0
      %1296 = vmatpush.msra.mxu0 0.0
      %1297 = vmatpush.msra.mxu0 0.0
      %1298 = vmatpush.msra.mxu0 0.0
      %1299 = vmatpush.msra.mxu0 0.0
      %1300 = vmatpush.msra.mxu0 0.0
      %1301 = vmatpush.msra.mxu0 0.0
      %1302 = vmatpush.msra.mxu0 0.0
      %1303 = vmatpush.msra.mxu0 0.0
      %v1304 = vand.u32 %v71, 4294901760
      %1305 = vmatpush.msra.mxu0 %v1304
      %v1306 = vand.u32 %v1211, 4294901760
      %v1307 = vsub.f32 %v1211, %v1306
      %v1308 = vand.u32 %v1307, 4294901760
      %1309 = vmatmul.f32.gmra.mxu0 %v1308
      %v1310 = vpop.f32.mrf.mxu0
      %v1311 = vadd.f32 %v1287, %v1310
      %1312 = vdwg.mxu0
      %1313 = vmatpush.msra.mxu0 0.0
      %1314 = vmatpush.msra.mxu0 0.0
      %1315 = vmatpush.msra.mxu0 0.0
      %1316 = vmatpush.msra.mxu0 0.0
      %1317 = vmatpush.msra.mxu0 0.0
      %1318 = vmatpush.msra.mxu0 0.0
      %1319 = vmatpush.msra.mxu0 0.0
      %1320 = vmatpush.msra.mxu0 0.0
      %1321 = vmatpush.msra.mxu0 0.0
      %1322 = vmatpush.msra.mxu0 0.0
      %1323 = vmatpush.msra.mxu0 0.0
      %1324 = vmatpush.msra.mxu0 0.0
      %1325 = vmatpush.msra.mxu0 0.0
      %1326 = vmatpush.msra.mxu0 0.0
      %1327 = vmatpush.msra.mxu0 0.0
      %v1328 = vand.u32 %v71, 4294901760
      %v1329 = vsub.f32 %v71, %v1328
      %v1330 = vand.u32 %v1329, 4294901760
      %1331 = vmatpush.msra.mxu0 %v1330
      %v1332 = vand.u32 %v1211, 4294901760
      %1333 = vmatmul.f32.gmra.mxu0 %v1332
      %v1334 = vpop.f32.mrf.mxu0
      %v1335 = vadd.f32 %v1311, %v1334
      %1336 = vdwg.mxu0
      %1337 = vmatpush.msra.mxu0 0.0
      %1338 = vmatpush.msra.mxu0 0.0
      %1339 = vmatpush.msra.mxu0 0.0
      %1340 = vmatpush.msra.mxu0 0.0
      %1341 = vmatpush.msra.mxu0 0.0
      %1342 = vmatpush.msra.mxu0 0.0
      %1343 = vmatpush.msra.mxu0 0.0
      %1344 = vmatpush.msra.mxu0 0.0
      %1345 = vmatpush.msra.mxu0 0.0
      %1346 = vmatpush.msra.mxu0 0.0
      %1347 = vmatpush.msra.mxu0 0.0
      %1348 = vmatpush.msra.mxu0 0.0
      %1349 = vmatpush.msra.mxu0 0.0
      %1350 = vmatpush.msra.mxu0 0.0
      %1351 = vmatpush.msra.mxu0 0.0
      %v1352 = vand.u32 %v71, 4294901760
      %1353 = vmatpush.msra.mxu0 %v1352
      %v1354 = vand.u32 %v1211, 4294901760
      %1355 = vmatmul.f32.gmra.mxu0 %v1354
      %v1356 = vpop.f32.mrf.mxu0
      %v1357 = vadd.f32 %v1335, %v1356
      %1358 = vdwg.mxu0
      %1363 = vrot.lane.b32.xlu0 %v78, 32
      %v1364 = vpop.permute.xlu0 %1363
      %1365 = vrot.lane.b32.xlu0 %v79, 32
      %v1366 = vpop.permute.xlu0 %1365
      %1367 = vrot.lane.b32.xlu0 %v80, 32
      %v1368 = vpop.permute.xlu0 %1367
      %1369 = vrot.lane.b32.xlu0 %v81, 32
      %v1370 = vpop.permute.xlu0 %1369
      %v1375 = vadd.f32 %v917, %v1364
      %v1376 = vadd.f32 %v917, %v1366
      %v1377 = vadd.f32 %v918, %v1368
      %v1378 = vadd.f32 %v918, %v1370
      %1380 = vset.pattern.permute.xlu0 0
      %1381 = vperm.xlu0 %1380, %v136
      %v1382 = vpop.permute.xlu0 %1381
      %1385 = vset.pattern.permute.xlu0 0
      %1386 = vperm.xlu0 %1385, %v137
      %v1387 = vpop.permute.xlu0 %1386
      %1390 = vset.pattern.permute.xlu0 0
      %1391 = vperm.xlu0 %1390, %v138
      %v1392 = vpop.permute.xlu0 %1391
      %1395 = vset.pattern.permute.xlu0 0
      %1396 = vperm.xlu0 %1395, %v139
      %v1397 = vpop.permute.xlu0 %1396
      %v1400 = vperm.slane %v108, 0
      %v1402 = vmul.f32 %v1382, %v1400
      %v1403 = vmul.f32 %v1387, %v1400
      %v1404 = vmul.f32 %v1392, %v1400
      %v1405 = vmul.f32 %v1397, %v1400
      %1410 = vrot.lane.b32.xlu0 %v1402, 32
      %v1411 = vpop.permute.xlu0 %1410
      %1412 = vrot.lane.b32.xlu0 %v1403, 32
      %v1413 = vpop.permute.xlu0 %1412
      %1414 = vrot.lane.b32.xlu0 %v1404, 32
      %v1415 = vpop.permute.xlu0 %1414
      %1416 = vrot.lane.b32.xlu0 %v1405, 32
      %v1417 = vpop.permute.xlu0 %1416
      %v1422 = vadd.f32 %v1375, %v1411
      %v1423 = vadd.f32 %v1376, %v1413
      %v1424 = vadd.f32 %v1377, %v1415
      %v1425 = vadd.f32 %v1378, %v1417
      %v1426 = vtanh.pop %v1422
      %v1427 = vtanh.pop %v1423
      %v1428 = vtanh.pop %v1424
      %v1429 = vtanh.pop %v1425
      %v1431 = vperm.slane %v107, 0
      %1432 = vrot.lane.b32.xlu0 %v1431, 32
      %v1433 = vpop.permute.xlu0 %1432
      %v1435 = vmul.f32 %v1426, %v1433
      %v1436 = vmul.f32 %v1427, %v1433
      %v1437 = vmul.f32 %v1428, %v1433
      %v1438 = vmul.f32 %v1429, %v1433
      %1443 = vrot.lane.b32.xlu0 %v1435, 96
      %v1444 = vpop.permute.xlu0 %1443
      %1445 = vrot.lane.b32.xlu0 %v1436, 96
      %v1446 = vpop.permute.xlu0 %1445
      %1447 = vrot.lane.b32.xlu0 %v1437, 96
      %v1448 = vpop.permute.xlu0 %1447
      %1449 = vrot.lane.b32.xlu0 %v1438, 96
      %v1450 = vpop.permute.xlu0 %1449
      %v1455 = vsel %vm147, %v1444, 0.0
      %1456 = vadd.xlane.f32.xlu0 %v1455
      %v1457 = vpop.xlane.xlu0 %1456
      %vm1458 = vcmask 257024
      %v1459 = vsel %vm1458, %v1446, 0.0
      %1460 = vadd.xlane.f32.xlu0 %v1459
      %v1461 = vpop.xlane.xlu0 %1460
      %v1462 = vsel %vm147, %v1448, 0.0
      %1463 = vadd.xlane.f32.xlu0 %v1462
      %v1464 = vpop.xlane.xlu0 %1463
      %v1465 = vsel %vm1458, %v1450, 0.0
      %1466 = vadd.xlane.f32.xlu0 %v1465
      %v1467 = vpop.xlane.xlu0 %1466
      %v1469 = vperm.slane %v83, 0
      %v1470 = vlaneseq
      %v1471 = vshrl.u32 %v1470, 7
      %1473 = vset.pattern.permute.xlu0 %v1471
      %1474 = vperm.xlu0 %1473, %v1469
      %v1475 = vpop.permute.xlu0 %1474
      %v1476 = vlaneseq
      %v1477 = vshrl.u32 %v1476, 7
      %v1478 = vadd.s32 %v1477, 8
      %1479 = vset.pattern.permute.xlu0 %v1478
      %1480 = vperm.xlu0 %1479, %v1469
      %v1481 = vpop.permute.xlu0 %1480
      %v1482 = vperm.slane %v83, 1
      %v1483 = vlaneseq
      %v1484 = vshrl.u32 %v1483, 7
      %1486 = vset.pattern.permute.xlu0 %v1484
      %1487 = vperm.xlu0 %1486, %v1482
      %v1488 = vpop.permute.xlu0 %1487
      %v1489 = vlaneseq
      %v1490 = vshrl.u32 %v1489, 7
      %v1491 = vadd.s32 %v1490, 8
      %1492 = vset.pattern.permute.xlu0 %v1491
      %1493 = vperm.xlu0 %1492, %v1482
      %v1494 = vpop.permute.xlu0 %1493
      %v1499 = vadd.f32 %v1457, %v1475
      %v1500 = vadd.f32 %v1461, %v1481
      %v1501 = vadd.f32 %v1464, %v1488
      %v1502 = vadd.f32 %v1467, %v1494
      %1507 = vset.pattern.permute.xlu0 0
      %1508 = vperm.xlu0 %1507, %v1499
      %v1509 = vpop.permute.xlu0 %1508
      %1510 = vset.pattern.permute.xlu0 0
      %1511 = vperm.xlu0 %1510, %v1500
      %v1512 = vpop.permute.xlu0 %1511
      %1513 = vset.pattern.permute.xlu0 0
      %1514 = vperm.xlu0 %1513, %v1501
      %v1515 = vpop.permute.xlu0 %1514
      %1516 = vset.pattern.permute.xlu0 0
      %1517 = vperm.xlu0 %1516, %v1502
      %v1518 = vpop.permute.xlu0 %1517
      %v1519 = vperm.slane %v1509, %v981
      %v1520 = vadd.s32 %v981, 4294967288
      %v1521 = vperm.slane %v1512, %v1520
      %vm1522 = vcmask 130112
      %v1523 = vsel %vm1522, %v1521, %v1519
      %v1524 = vperm.slane %v1515, %v981
      %v1525 = vperm.slane %v1518, %v1520
      %v1526 = vsel %vm1522, %v1525, %v1524
      %v1527 = vsel %vm984, %v1526, %v1523
      %vm1529 = vcmask 91136
      %v1530 = vsel %vm1529, %v1527, -inf
      %1531 = vmax.xlane.f32.xlu0 %v1530
      %v1532 = vpop.xlane.xlu0 %1531
      %v1534 = vperm.slane %v1532, 0
      %v1535 = vperm.slane %v1532, 1
      %v1538 = vsub.f32 %v1499, %v1534
      %v1539 = vsub.f32 %v1500, %v1534
      %v1540 = vsub.f32 %v1501, %v1535
      %v1541 = vsub.f32 %v1502, %v1535
      %v1542 = vmul.f32 %v1538, 1.442695
      %v1543 = vpow.pop %v1542
      %v1544 = vmul.f32 %v1539, 1.442695
      %v1545 = vpow.pop %v1544
      %v1546 = vmul.f32 %v1540, 1.442695
      %v1547 = vpow.pop %v1546
      %v1548 = vmul.f32 %v1541, 1.442695
      %v1549 = vpow.pop %v1548
      %1554 = vset.pattern.permute.xlu0 0
      %1555 = vperm.xlu0 %1554, %v1543
      %v1556 = vpop.permute.xlu0 %1555
      %1557 = vset.pattern.permute.xlu0 0
      %1558 = vperm.xlu0 %1557, %v1545
      %v1559 = vpop.permute.xlu0 %1558
      %1560 = vset.pattern.permute.xlu0 0
      %1561 = vperm.xlu0 %1560, %v1547
      %v1562 = vpop.permute.xlu0 %1561
      %1563 = vset.pattern.permute.xlu0 0
      %1564 = vperm.xlu0 %1563, %v1549
      %v1565 = vpop.permute.xlu0 %1564
      %v1566 = vperm.slane %v1556, %v981
      %v1567 = vperm.slane %v1559, %v1520
      %v1568 = vsel %vm1522, %v1567, %v1566
      %v1569 = vperm.slane %v1562, %v981
      %v1570 = vperm.slane %v1565, %v1520
      %v1571 = vsel %vm1522, %v1570, %v1569
      %v1572 = vsel %vm984, %v1571, %v1568
      %v1574 = vsel %vm1529, %v1572, 0.0
      %1575 = vadd.xlane.f32.xlu0 %v1574
      %v1576 = vpop.xlane.xlu0 %1575
      %v1578 = vperm.slane %v1576, 0
      %v1579 = vperm.slane %v1576, 1
      %v1582 = vrcp.pop %v1578
      %v1583 = vmul.f32 %v1578, %v1582
      %v1584 = vsub.f32 1.0, %v1583
      %v1585 = vmul.f32 %v1582, %v1584
      %v1586 = vadd.f32 %v1582, %v1585
      %vm1587 = vweird.f32 %v1578
      %vm1588 = vweird.f32 %v1582
      %vm1589 = vmor %vm1587, %vm1588
      %v1590 = vsel %vm1589, %v1582, %v1586
      %v1591 = vand.u32 2147483647, %v1578
      %vm1592 = vcmp.eq.f32.partialorder %v1591, 8.507059e+37
      %v1593 = vand.u32 %v1578, 2147483648
      %v1594 = vor.u32 1.1754944e-38, %v1593
      %v1595 = vsel %vm1592, %v1594, %v1590
      %v1596 = vmul.f32 %v1543, %v1595
      %v1597 = vmul.f32 %v1545, %v1595
      %v1598 = vrcp.pop %v1579
      %v1599 = vmul.f32 %v1579, %v1598
      %v1600 = vsub.f32 1.0, %v1599
      %v1601 = vmul.f32 %v1598, %v1600
      %v1602 = vadd.f32 %v1598, %v1601
      %vm1603 = vweird.f32 %v1579
      %vm1604 = vweird.f32 %v1598
      %vm1605 = vmor %vm1603, %vm1604
      %v1606 = vsel %vm1605, %v1598, %v1602
      %v1607 = vand.u32 2147483647, %v1579
      %vm1608 = vcmp.eq.f32.partialorder %v1607, 8.507059e+37
      %v1609 = vand.u32 %v1579, 2147483648
      %v1610 = vor.u32 1.1754944e-38, %v1609
      %v1611 = vsel %vm1608, %v1610, %v1606
      %v1612 = vmul.f32 %v1547, %v1611
      %v1613 = vmul.f32 %v1549, %v1611
      %1616 = vset.pattern.permute.xlu0 0
      %1617 = vperm.xlu0 %1616, %v1596
      %v1618 = vpop.permute.xlu0 %1617
      %1619 = vset.pattern.permute.xlu0 0
      %1620 = vperm.xlu0 %1619, %v1597
      %v1621 = vpop.permute.xlu0 %1620
      %v1622 = vperm.slane %v1618, %v981
      %v1623 = vperm.slane %v1621, %v1520
      %v1624 = vsel %vm1522, %v1623, %v1622
      %vm1625 = vcmask 97280
      %v1626 = vsel %vm1625, %v1624, 0
      %vm1628 = vcmask 1043456
      %v1630 = vsel %vm1628, %v73, 0
      %1632 = vmatpush.msra.mxu0 0.0
      %1633 = vmatpush.msra.mxu0 0.0
      %1634 = vmatpush.msra.mxu0 0.0
      %1635 = vmatpush.msra.mxu0 0.0
      %1636 = vmatpush.msra.mxu0 0.0
      %1637 = vmatpush.msra.mxu0 0.0
      %1638 = vmatpush.msra.mxu0 0.0
      %1639 = vmatpush.msra.mxu0 0.0
      %1640 = vmatpush.msra.mxu0 0.0
      %1641 = vmatpush.msra.mxu0 0.0
      %1642 = vmatpush.msra.mxu0 0.0
      %1643 = vmatpush.msra.mxu0 0.0
      %1644 = vmatpush.msra.mxu0 0.0
      %1645 = vmatpush.msra.mxu0 0.0
      %v1646 = vand.u32 %v1630, 4294901760
      %1647 = vmatpush.msra.mxu0 %v1646
      %v1648 = vand.u32 %v72, 4294901760
      %1649 = vmatpush.msra.mxu0 %v1648
      %v1650 = vand.u32 %v1626, 4294901760
      %v1651 = vsub.f32 %v1626, %v1650
      %v1652 = vand.u32 %v1651, 4294901760
      %v1653 = vsub.f32 %v1651, %v1652
      %v1654 = vand.u32 %v1653, 4294901760
      %1655 = vmatmul.f32.gmra.mxu0 %v1654
      %v1656 = vpop.f32.mrf.mxu0
      %v1657 = vadd.f32 0.0, %v1656
      %1658 = vdwg.mxu0
      %1659 = vmatpush.msra.mxu0 0.0
      %1660 = vmatpush.msra.mxu0 0.0
      %1661 = vmatpush.msra.mxu0 0.0
      %1662 = vmatpush.msra.mxu0 0.0
      %1663 = vmatpush.msra.mxu0 0.0
      %1664 = vmatpush.msra.mxu0 0.0
      %1665 = vmatpush.msra.mxu0 0.0
      %1666 = vmatpush.msra.mxu0 0.0
      %1667 = vmatpush.msra.mxu0 0.0
      %1668 = vmatpush.msra.mxu0 0.0
      %1669 = vmatpush.msra.mxu0 0.0
      %1670 = vmatpush.msra.mxu0 0.0
      %1671 = vmatpush.msra.mxu0 0.0
      %1672 = vmatpush.msra.mxu0 0.0
      %v1673 = vand.u32 %v1630, 4294901760
      %v1674 = vsub.f32 %v1630, %v1673
      %v1675 = vand.u32 %v1674, 4294901760
      %v1676 = vsub.f32 %v1674, %v1675
      %v1677 = vand.u32 %v1676, 4294901760
      %1678 = vmatpush.msra.mxu0 %v1677
      %v1679 = vand.u32 %v72, 4294901760
      %v1680 = vsub.f32 %v72, %v1679
      %v1681 = vand.u32 %v1680, 4294901760
      %v1682 = vsub.f32 %v1680, %v1681
      %v1683 = vand.u32 %v1682, 4294901760
      %1684 = vmatpush.msra.mxu0 %v1683
      %v1685 = vand.u32 %v1626, 4294901760
      %1686 = vmatmul.f32.gmra.mxu0 %v1685
      %v1687 = vpop.f32.mrf.mxu0
      %v1688 = vadd.f32 %v1657, %v1687
      %1689 = vdwg.mxu0
      %1690 = vmatpush.msra.mxu0 0.0
      %1691 = vmatpush.msra.mxu0 0.0
      %1692 = vmatpush.msra.mxu0 0.0
      %1693 = vmatpush.msra.mxu0 0.0
      %1694 = vmatpush.msra.mxu0 0.0
      %1695 = vmatpush.msra.mxu0 0.0
      %1696 = vmatpush.msra.mxu0 0.0
      %1697 = vmatpush.msra.mxu0 0.0
      %1698 = vmatpush.msra.mxu0 0.0
      %1699 = vmatpush.msra.mxu0 0.0
      %1700 = vmatpush.msra.mxu0 0.0
      %1701 = vmatpush.msra.mxu0 0.0
      %1702 = vmatpush.msra.mxu0 0.0
      %1703 = vmatpush.msra.mxu0 0.0
      %v1704 = vand.u32 %v1630, 4294901760
      %v1705 = vsub.f32 %v1630, %v1704
      %1706 = vmatpush.msra.mxu0 %v1705
      %v1707 = vand.u32 %v72, 4294901760
      %v1708 = vsub.f32 %v72, %v1707
      %1709 = vmatpush.msra.mxu0 %v1708
      %v1710 = vand.u32 %v1626, 4294901760
      %v1711 = vsub.f32 %v1626, %v1710
      %1712 = vmatmul.f32.gmra.mxu0 %v1711
      %v1713 = vpop.f32.mrf.mxu0
      %v1714 = vadd.f32 %v1688, %v1713
      %1715 = vdwg.mxu0
      %1716 = vmatpush.msra.mxu0 0.0
      %1717 = vmatpush.msra.mxu0 0.0
      %1718 = vmatpush.msra.mxu0 0.0
      %1719 = vmatpush.msra.mxu0 0.0
      %1720 = vmatpush.msra.mxu0 0.0
      %1721 = vmatpush.msra.mxu0 0.0
      %1722 = vmatpush.msra.mxu0 0.0
      %1723 = vmatpush.msra.mxu0 0.0
      %1724 = vmatpush.msra.mxu0 0.0
      %1725 = vmatpush.msra.mxu0 0.0
      %1726 = vmatpush.msra.mxu0 0.0
      %1727 = vmatpush.msra.mxu0 0.0
      %1728 = vmatpush.msra.mxu0 0.0
      %1729 = vmatpush.msra.mxu0 0.0
      %v1730 = vand.u32 %v1630, 4294901760
      %1731 = vmatpush.msra.mxu0 %v1730
      %v1732 = vand.u32 %v72, 4294901760
      %1733 = vmatpush.msra.mxu0 %v1732
      %v1734 = vand.u32 %v1626, 4294901760
      %v1735 = vsub.f32 %v1626, %v1734
      %v1736 = vand.u32 %v1735, 4294901760
      %1737 = vmatmul.f32.gmra.mxu0 %v1736
      %v1738 = vpop.f32.mrf.mxu0
      %v1739 = vadd.f32 %v1714, %v1738
      %1740 = vdwg.mxu0
      %1741 = vmatpush.msra.mxu0 0.0
      %1742 = vmatpush.msra.mxu0 0.0
      %1743 = vmatpush.msra.mxu0 0.0
      %1744 = vmatpush.msra.mxu0 0.0
      %1745 = vmatpush.msra.mxu0 0.0
      %1746 = vmatpush.msra.mxu0 0.0
      %1747 = vmatpush.msra.mxu0 0.0
      %1748 = vmatpush.msra.mxu0 0.0
      %1749 = vmatpush.msra.mxu0 0.0
      %1750 = vmatpush.msra.mxu0 0.0
      %1751 = vmatpush.msra.mxu0 0.0
      %1752 = vmatpush.msra.mxu0 0.0
      %1753 = vmatpush.msra.mxu0 0.0
      %1754 = vmatpush.msra.mxu0 0.0
      %v1755 = vand.u32 %v1630, 4294901760
      %v1756 = vsub.f32 %v1630, %v1755
      %v1757 = vand.u32 %v1756, 4294901760
      %1758 = vmatpush.msra.mxu0 %v1757
      %v1759 = vand.u32 %v72, 4294901760
      %v1760 = vsub.f32 %v72, %v1759
      %v1761 = vand.u32 %v1760, 4294901760
      %1762 = vmatpush.msra.mxu0 %v1761
      %v1763 = vand.u32 %v1626, 4294901760
      %1764 = vmatmul.f32.gmra.mxu0 %v1763
      %v1765 = vpop.f32.mrf.mxu0
      %v1766 = vadd.f32 %v1739, %v1765
      %1767 = vdwg.mxu0
      %1768 = vmatpush.msra.mxu0 0.0
      %1769 = vmatpush.msra.mxu0 0.0
      %1770 = vmatpush.msra.mxu0 0.0
      %1771 = vmatpush.msra.mxu0 0.0
      %1772 = vmatpush.msra.mxu0 0.0
      %1773 = vmatpush.msra.mxu0 0.0
      %1774 = vmatpush.msra.mxu0 0.0
      %1775 = vmatpush.msra.mxu0 0.0
      %1776 = vmatpush.msra.mxu0 0.0
      %1777 = vmatpush.msra.mxu0 0.0
      %1778 = vmatpush.msra.mxu0 0.0
      %1779 = vmatpush.msra.mxu0 0.0
      %1780 = vmatpush.msra.mxu0 0.0
      %1781 = vmatpush.msra.mxu0 0.0
      %v1782 = vand.u32 %v1630, 4294901760
      %1783 = vmatpush.msra.mxu0 %v1782
      %v1784 = vand.u32 %v72, 4294901760
      %1785 = vmatpush.msra.mxu0 %v1784
      %v1786 = vand.u32 %v1626, 4294901760
      %1787 = vmatmul.f32.gmra.mxu0 %v1786
      %v1788 = vpop.f32.mrf.mxu0
      %v1789 = vadd.f32 %v1766, %v1788
      %1790 = vdwg.mxu0
      %1793 = vset.pattern.permute.xlu0 0
      %1794 = vperm.xlu0 %1793, %v1612
      %v1795 = vpop.permute.xlu0 %1794
      %1796 = vset.pattern.permute.xlu0 0
      %1797 = vperm.xlu0 %1796, %v1613
      %v1798 = vpop.permute.xlu0 %1797
      %v1799 = vperm.slane %v1795, %v981
      %v1800 = vperm.slane %v1798, %v1520
      %v1801 = vsel %vm1522, %v1800, %v1799
      %v1802 = vsel %vm1625, %v1801, 0
      %v1805 = vsel %vm1628, %v75, 0
      %1807 = vmatpush.msra.mxu0 0.0
      %1808 = vmatpush.msra.mxu0 0.0
      %1809 = vmatpush.msra.mxu0 0.0
      %1810 = vmatpush.msra.mxu0 0.0
      %1811 = vmatpush.msra.mxu0 0.0
      %1812 = vmatpush.msra.mxu0 0.0
      %1813 = vmatpush.msra.mxu0 0.0
      %1814 = vmatpush.msra.mxu0 0.0
      %1815 = vmatpush.msra.mxu0 0.0
      %1816 = vmatpush.msra.mxu0 0.0
      %1817 = vmatpush.msra.mxu0 0.0
      %1818 = vmatpush.msra.mxu0 0.0
      %1819 = vmatpush.msra.mxu0 0.0
      %1820 = vmatpush.msra.mxu0 0.0
      %v1821 = vand.u32 %v1805, 4294901760
      %1822 = vmatpush.msra.mxu0 %v1821
      %v1823 = vand.u32 %v74, 4294901760
      %1824 = vmatpush.msra.mxu0 %v1823
      %v1825 = vand.u32 %v1802, 4294901760
      %v1826 = vsub.f32 %v1802, %v1825
      %v1827 = vand.u32 %v1826, 4294901760
      %v1828 = vsub.f32 %v1826, %v1827
      %v1829 = vand.u32 %v1828, 4294901760
      %1830 = vmatmul.f32.gmra.mxu0 %v1829
      %v1831 = vpop.f32.mrf.mxu0
      %v1832 = vadd.f32 0.0, %v1831
      %1833 = vdwg.mxu0
      %1834 = vmatpush.msra.mxu0 0.0
      %1835 = vmatpush.msra.mxu0 0.0
      %1836 = vmatpush.msra.mxu0 0.0
      %1837 = vmatpush.msra.mxu0 0.0
      %1838 = vmatpush.msra.mxu0 0.0
      %1839 = vmatpush.msra.mxu0 0.0
      %1840 = vmatpush.msra.mxu0 0.0
      %1841 = vmatpush.msra.mxu0 0.0
      %1842 = vmatpush.msra.mxu0 0.0
      %1843 = vmatpush.msra.mxu0 0.0
      %1844 = vmatpush.msra.mxu0 0.0
      %1845 = vmatpush.msra.mxu0 0.0
      %1846 = vmatpush.msra.mxu0 0.0
      %1847 = vmatpush.msra.mxu0 0.0
      %v1848 = vand.u32 %v1805, 4294901760
      %v1849 = vsub.f32 %v1805, %v1848
      %v1850 = vand.u32 %v1849, 4294901760
      %v1851 = vsub.f32 %v1849, %v1850
      %v1852 = vand.u32 %v1851, 4294901760
      %1853 = vmatpush.msra.mxu0 %v1852
      %v1854 = vand.u32 %v74, 4294901760
      %v1855 = vsub.f32 %v74, %v1854
      %v1856 = vand.u32 %v1855, 4294901760
      %v1857 = vsub.f32 %v1855, %v1856
      %v1858 = vand.u32 %v1857, 4294901760
      %1859 = vmatpush.msra.mxu0 %v1858
      %v1860 = vand.u32 %v1802, 4294901760
      %1861 = vmatmul.f32.gmra.mxu0 %v1860
      %v1862 = vpop.f32.mrf.mxu0
      %v1863 = vadd.f32 %v1832, %v1862
      %1864 = vdwg.mxu0
      %1865 = vmatpush.msra.mxu0 0.0
      %1866 = vmatpush.msra.mxu0 0.0
      %1867 = vmatpush.msra.mxu0 0.0
      %1868 = vmatpush.msra.mxu0 0.0
      %1869 = vmatpush.msra.mxu0 0.0
      %1870 = vmatpush.msra.mxu0 0.0
      %1871 = vmatpush.msra.mxu0 0.0
      %1872 = vmatpush.msra.mxu0 0.0
      %1873 = vmatpush.msra.mxu0 0.0
      %1874 = vmatpush.msra.mxu0 0.0
      %1875 = vmatpush.msra.mxu0 0.0
      %1876 = vmatpush.msra.mxu0 0.0
      %1877 = vmatpush.msra.mxu0 0.0
      %1878 = vmatpush.msra.mxu0 0.0
      %v1879 = vand.u32 %v1805, 4294901760
      %v1880 = vsub.f32 %v1805, %v1879
      %1881 = vmatpush.msra.mxu0 %v1880
      %v1882 = vand.u32 %v74, 4294901760
      %v1883 = vsub.f32 %v74, %v1882
      %1884 = vmatpush.msra.mxu0 %v1883
      %v1885 = vand.u32 %v1802, 4294901760
      %v1886 = vsub.f32 %v1802, %v1885
      %1887 = vmatmul.f32.gmra.mxu0 %v1886
      %v1888 = vpop.f32.mrf.mxu0
      %v1889 = vadd.f32 %v1863, %v1888
      %1890 = vdwg.mxu0
      %1891 = vmatpush.msra.mxu0 0.0
      %1892 = vmatpush.msra.mxu0 0.0
      %1893 = vmatpush.msra.mxu0 0.0
      %1894 = vmatpush.msra.mxu0 0.0
      %1895 = vmatpush.msra.mxu0 0.0
      %1896 = vmatpush.msra.mxu0 0.0
      %1897 = vmatpush.msra.mxu0 0.0
      %1898 = vmatpush.msra.mxu0 0.0
      %1899 = vmatpush.msra.mxu0 0.0
      %1900 = vmatpush.msra.mxu0 0.0
      %1901 = vmatpush.msra.mxu0 0.0
      %1902 = vmatpush.msra.mxu0 0.0
      %1903 = vmatpush.msra.mxu0 0.0
      %1904 = vmatpush.msra.mxu0 0.0
      %v1905 = vand.u32 %v1805, 4294901760
      %1906 = vmatpush.msra.mxu0 %v1905
      %v1907 = vand.u32 %v74, 4294901760
      %1908 = vmatpush.msra.mxu0 %v1907
      %v1909 = vand.u32 %v1802, 4294901760
      %v1910 = vsub.f32 %v1802, %v1909
      %v1911 = vand.u32 %v1910, 4294901760
      %1912 = vmatmul.f32.gmra.mxu0 %v1911
      %v1913 = vpop.f32.mrf.mxu0
      %v1914 = vadd.f32 %v1889, %v1913
      %1915 = vdwg.mxu0
      %1916 = vmatpush.msra.mxu0 0.0
      %1917 = vmatpush.msra.mxu0 0.0
      %1918 = vmatpush.msra.mxu0 0.0
      %1919 = vmatpush.msra.mxu0 0.0
      %1920 = vmatpush.msra.mxu0 0.0
      %1921 = vmatpush.msra.mxu0 0.0
      %1922 = vmatpush.msra.mxu0 0.0
      %1923 = vmatpush.msra.mxu0 0.0
      %1924 = vmatpush.msra.mxu0 0.0
      %1925 = vmatpush.msra.mxu0 0.0
      %1926 = vmatpush.msra.mxu0 0.0
      %1927 = vmatpush.msra.mxu0 0.0
      %1928 = vmatpush.msra.mxu0 0.0
      %1929 = vmatpush.msra.mxu0 0.0
      %v1930 = vand.u32 %v1805, 4294901760
      %v1931 = vsub.f32 %v1805, %v1930
      %v1932 = vand.u32 %v1931, 4294901760
      %1933 = vmatpush.msra.mxu0 %v1932
      %v1934 = vand.u32 %v74, 4294901760
      %v1935 = vsub.f32 %v74, %v1934
      %v1936 = vand.u32 %v1935, 4294901760
      %1937 = vmatpush.msra.mxu0 %v1936
      %v1938 = vand.u32 %v1802, 4294901760
      %1939 = vmatmul.f32.gmra.mxu0 %v1938
      %v1940 = vpop.f32.mrf.mxu0
      %v1941 = vadd.f32 %v1914, %v1940
      %1942 = vdwg.mxu0
      %1943 = vmatpush.msra.mxu0 0.0
      %1944 = vmatpush.msra.mxu0 0.0
      %1945 = vmatpush.msra.mxu0 0.0
      %1946 = vmatpush.msra.mxu0 0.0
      %1947 = vmatpush.msra.mxu0 0.0
      %1948 = vmatpush.msra.mxu0 0.0
      %1949 = vmatpush.msra.mxu0 0.0
      %1950 = vmatpush.msra.mxu0 0.0
      %1951 = vmatpush.msra.mxu0 0.0
      %1952 = vmatpush.msra.mxu0 0.0
      %1953 = vmatpush.msra.mxu0 0.0
      %1954 = vmatpush.msra.mxu0 0.0
      %1955 = vmatpush.msra.mxu0 0.0
      %1956 = vmatpush.msra.mxu0 0.0
      %v1957 = vand.u32 %v1805, 4294901760
      %1958 = vmatpush.msra.mxu0 %v1957
      %v1959 = vand.u32 %v74, 4294901760
      %1960 = vmatpush.msra.mxu0 %v1959
      %v1961 = vand.u32 %v1802, 4294901760
      %1962 = vmatmul.f32.gmra.mxu0 %v1961
      %v1963 = vpop.f32.mrf.mxu0
      %v1964 = vadd.f32 %v1941, %v1963
      %1965 = vdwg.mxu0
      %v1966 = vadd.f32 %v1204, %v1789
      %v1967 = vadd.f32 %v1357, %v1964
      %v1968 = vmul.f32 %v1966, 0.5
      %v1969 = vmul.f32 %v1967, 0.5
      %v1972 = vrot.slane %v1969, 7
      %v1973 = vsel %vm984, %v1972, %v1968
      %1975 = vrot.lane.b32.xlu0 %v724, 64
      %v1976 = vpop.permute.xlu0 %1975
      %v1978 = vsel %vm147, %v1973, %v1976
      %v1980 = vsel %vm149, %v1978, 0
      %1982 = vmatpush.msra.mxu0 0.0
      %1983 = vmatpush.msra.mxu0 0.0
      %1984 = vmatpush.msra.mxu0 0.0
      %1985 = vmatpush.msra.mxu0 0.0
      %1986 = vmatpush.msra.mxu0 0.0
      %1987 = vmatpush.msra.mxu0 0.0
      %1988 = vmatpush.msra.mxu0 0.0
      %1989 = vmatpush.msra.mxu0 0.0
      %v1990 = vand.u32 %v116, 4294901760
      %1991 = vmatpush.msra.mxu0 %v1990
      %v1992 = vand.u32 %v115, 4294901760
      %1993 = vmatpush.msra.mxu0 %v1992
      %v1994 = vand.u32 %v114, 4294901760
      %1995 = vmatpush.msra.mxu0 %v1994
      %v1996 = vand.u32 %v113, 4294901760
      %1997 = vmatpush.msra.mxu0 %v1996
      %v1998 = vand.u32 %v112, 4294901760
      %1999 = vmatpush.msra.mxu0 %v1998
      %v2000 = vand.u32 %v111, 4294901760
      %2001 = vmatpush.msra.mxu0 %v2000
      %v2002 = vand.u32 %v110, 4294901760
      %2003 = vmatpush.msra.mxu0 %v2002
      %v2004 = vand.u32 %v109, 4294901760
      %2005 = vmatpush.msra.mxu0 %v2004
      %v2006 = vand.u32 %v1980, 4294901760
      %v2007 = vsub.f32 %v1980, %v2006
      %v2008 = vand.u32 %v2007, 4294901760
      %v2009 = vsub.f32 %v2007, %v2008
      %v2010 = vand.u32 %v2009, 4294901760
      %2011 = vmatmul.f32.gmra.mxu0 %v2010
      %v2012 = vpop.f32.mrf.mxu0
      %v2013 = vadd.f32 0.0, %v2012
      %2014 = vdwg.mxu0
      %2015 = vmatpush.msra.mxu0 0.0
      %2016 = vmatpush.msra.mxu0 0.0
      %2017 = vmatpush.msra.mxu0 0.0
      %2018 = vmatpush.msra.mxu0 0.0
      %2019 = vmatpush.msra.mxu0 0.0
      %2020 = vmatpush.msra.mxu0 0.0
      %2021 = vmatpush.msra.mxu0 0.0
      %2022 = vmatpush.msra.mxu0 0.0
      %v2023 = vand.u32 %v116, 4294901760
      %v2024 = vsub.f32 %v116, %v2023
      %v2025 = vand.u32 %v2024, 4294901760
      %v2026 = vsub.f32 %v2024, %v2025
      %v2027 = vand.u32 %v2026, 4294901760
      %2028 = vmatpush.msra.mxu0 %v2027
      %v2029 = vand.u32 %v115, 4294901760
      %v2030 = vsub.f32 %v115, %v2029
      %v2031 = vand.u32 %v2030, 4294901760
      %v2032 = vsub.f32 %v2030, %v2031
      %v2033 = vand.u32 %v2032, 4294901760
      %2034 = vmatpush.msra.mxu0 %v2033
      %v2035 = vand.u32 %v114, 4294901760
      %v2036 = vsub.f32 %v114, %v2035
      %v2037 = vand.u32 %v2036, 4294901760
      %v2038 = vsub.f32 %v2036, %v2037
      %v2039 = vand.u32 %v2038, 4294901760
      %2040 = vmatpush.msra.mxu0 %v2039
      %v2041 = vand.u32 %v113, 4294901760
      %v2042 = vsub.f32 %v113, %v2041
      %v2043 = vand.u32 %v2042, 4294901760
      %v2044 = vsub.f32 %v2042, %v2043
      %v2045 = vand.u32 %v2044, 4294901760
      %2046 = vmatpush.msra.mxu0 %v2045
      %v2047 = vand.u32 %v112, 4294901760
      %v2048 = vsub.f32 %v112, %v2047
      %v2049 = vand.u32 %v2048, 4294901760
      %v2050 = vsub.f32 %v2048, %v2049
      %v2051 = vand.u32 %v2050, 4294901760
      %2052 = vmatpush.msra.mxu0 %v2051
      %v2053 = vand.u32 %v111, 4294901760
      %v2054 = vsub.f32 %v111, %v2053
      %v2055 = vand.u32 %v2054, 4294901760
      %v2056 = vsub.f32 %v2054, %v2055
      %v2057 = vand.u32 %v2056, 4294901760
      %2058 = vmatpush.msra.mxu0 %v2057
      %v2059 = vand.u32 %v110, 4294901760
      %v2060 = vsub.f32 %v110, %v2059
      %v2061 = vand.u32 %v2060, 4294901760
      %v2062 = vsub.f32 %v2060, %v2061
      %v2063 = vand.u32 %v2062, 4294901760
      %2064 = vmatpush.msra.mxu0 %v2063
      %v2065 = vand.u32 %v109, 4294901760
      %v2066 = vsub.f32 %v109, %v2065
      %v2067 = vand.u32 %v2066, 4294901760
      %v2068 = vsub.f32 %v2066, %v2067
      %v2069 = vand.u32 %v2068, 4294901760
      %2070 = vmatpush.msra.mxu0 %v2069
      %v2071 = vand.u32 %v1980, 4294901760
      %2072 = vmatmul.f32.gmra.mxu0 %v2071
      %v2073 = vpop.f32.mrf.mxu0
      %v2074 = vadd.f32 %v2013, %v2073
      %2075 = vdwg.mxu0
      %2076 = vmatpush.msra.mxu0 0.0
      %2077 = vmatpush.msra.mxu0 0.0
      %2078 = vmatpush.msra.mxu0 0.0
      %2079 = vmatpush.msra.mxu0 0.0
      %2080 = vmatpush.msra.mxu0 0.0
      %2081 = vmatpush.msra.mxu0 0.0
      %2082 = vmatpush.msra.mxu0 0.0
      %2083 = vmatpush.msra.mxu0 0.0
      %v2084 = vand.u32 %v116, 4294901760
      %v2085 = vsub.f32 %v116, %v2084
      %2086 = vmatpush.msra.mxu0 %v2085
      %v2087 = vand.u32 %v115, 4294901760
      %v2088 = vsub.f32 %v115, %v2087
      %2089 = vmatpush.msra.mxu0 %v2088
      %v2090 = vand.u32 %v114, 4294901760
      %v2091 = vsub.f32 %v114, %v2090
      %2092 = vmatpush.msra.mxu0 %v2091
      %v2093 = vand.u32 %v113, 4294901760
      %v2094 = vsub.f32 %v113, %v2093
      %2095 = vmatpush.msra.mxu0 %v2094
      %v2096 = vand.u32 %v112, 4294901760
      %v2097 = vsub.f32 %v112, %v2096
      %2098 = vmatpush.msra.mxu0 %v2097
      %v2099 = vand.u32 %v111, 4294901760
      %v2100 = vsub.f32 %v111, %v2099
      %2101 = vmatpush.msra.mxu0 %v2100
      %v2102 = vand.u32 %v110, 4294901760
      %v2103 = vsub.f32 %v110, %v2102
      %2104 = vmatpush.msra.mxu0 %v2103
      %v2105 = vand.u32 %v109, 4294901760
      %v2106 = vsub.f32 %v109, %v2105
      %2107 = vmatpush.msra.mxu0 %v2106
      %v2108 = vand.u32 %v1980, 4294901760
      %v2109 = vsub.f32 %v1980, %v2108
      %2110 = vmatmul.f32.gmra.mxu0 %v2109
      %v2111 = vpop.f32.mrf.mxu0
      %v2112 = vadd.f32 %v2074, %v2111
      %2113 = vdwg.mxu0
      %2114 = vmatpush.msra.mxu0 0.0
      %2115 = vmatpush.msra.mxu0 0.0
      %2116 = vmatpush.msra.mxu0 0.0
      %2117 = vmatpush.msra.mxu0 0.0
      %2118 = vmatpush.msra.mxu0 0.0
      %2119 = vmatpush.msra.mxu0 0.0
      %2120 = vmatpush.msra.mxu0 0.0
      %2121 = vmatpush.msra.mxu0 0.0
      %v2122 = vand.u32 %v116, 4294901760
      %2123 = vmatpush.msra.mxu0 %v2122
      %v2124 = vand.u32 %v115, 4294901760
      %2125 = vmatpush.msra.mxu0 %v2124
      %v2126 = vand.u32 %v114, 4294901760
      %2127 = vmatpush.msra.mxu0 %v2126
      %v2128 = vand.u32 %v113, 4294901760
      %2129 = vmatpush.msra.mxu0 %v2128
      %v2130 = vand.u32 %v112, 4294901760
      %2131 = vmatpush.msra.mxu0 %v2130
      %v2132 = vand.u32 %v111, 4294901760
      %2133 = vmatpush.msra.mxu0 %v2132
      %v2134 = vand.u32 %v110, 4294901760
      %2135 = vmatpush.msra.mxu0 %v2134
      %v2136 = vand.u32 %v109, 4294901760
      %2137 = vmatpush.msra.mxu0 %v2136
      %v2138 = vand.u32 %v1980, 4294901760
      %v2139 = vsub.f32 %v1980, %v2138
      %v2140 = vand.u32 %v2139, 4294901760
      %2141 = vmatmul.f32.gmra.mxu0 %v2140
      %v2142 = vpop.f32.mrf.mxu0
      %v2143 = vadd.f32 %v2112, %v2142
      %2144 = vdwg.mxu0
      %2145 = vmatpush.msra.mxu0 0.0
      %2146 = vmatpush.msra.mxu0 0.0
      %2147 = vmatpush.msra.mxu0 0.0
      %2148 = vmatpush.msra.mxu0 0.0
      %2149 = vmatpush.msra.mxu0 0.0
      %2150 = vmatpush.msra.mxu0 0.0
      %2151 = vmatpush.msra.mxu0 0.0
      %2152 = vmatpush.msra.mxu0 0.0
      %v2153 = vand.u32 %v116, 4294901760
      %v2154 = vsub.f32 %v116, %v2153
      %v2155 = vand.u32 %v2154, 4294901760
      %2156 = vmatpush.msra.mxu0 %v2155
      %v2157 = vand.u32 %v115, 4294901760
      %v2158 = vsub.f32 %v115, %v2157
      %v2159 = vand.u32 %v2158, 4294901760
      %2160 = vmatpush.msra.mxu0 %v2159
      %v2161 = vand.u32 %v114, 4294901760
      %v2162 = vsub.f32 %v114, %v2161
      %v2163 = vand.u32 %v2162, 4294901760
      %2164 = vmatpush.msra.mxu0 %v2163
      %v2165 = vand.u32 %v113, 4294901760
      %v2166 = vsub.f32 %v113, %v2165
      %v2167 = vand.u32 %v2166, 4294901760
      %2168 = vmatpush.msra.mxu0 %v2167
      %v2169 = vand.u32 %v112, 4294901760
      %v2170 = vsub.f32 %v112, %v2169
      %v2171 = vand.u32 %v2170, 4294901760
      %2172 = vmatpush.msra.mxu0 %v2171
      %v2173 = vand.u32 %v111, 4294901760
      %v2174 = vsub.f32 %v111, %v2173
      %v2175 = vand.u32 %v2174, 4294901760
      %2176 = vmatpush.msra.mxu0 %v2175
      %v2177 = vand.u32 %v110, 4294901760
      %v2178 = vsub.f32 %v110, %v2177
      %v2179 = vand.u32 %v2178, 4294901760
      %2180 = vmatpush.msra.mxu0 %v2179
      %v2181 = vand.u32 %v109, 4294901760
      %v2182 = vsub.f32 %v109, %v2181
      %v2183 = vand.u32 %v2182, 4294901760
      %2184 = vmatpush.msra.mxu0 %v2183
      %v2185 = vand.u32 %v1980, 4294901760
      %2186 = vmatmul.f32.gmra.mxu0 %v2185
      %v2187 = vpop.f32.mrf.mxu0
      %v2188 = vadd.f32 %v2143, %v2187
      %2189 = vdwg.mxu0
      %2190 = vmatpush.msra.mxu0 0.0
      %2191 = vmatpush.msra.mxu0 0.0
      %2192 = vmatpush.msra.mxu0 0.0
      %2193 = vmatpush.msra.mxu0 0.0
      %2194 = vmatpush.msra.mxu0 0.0
      %2195 = vmatpush.msra.mxu0 0.0
      %2196 = vmatpush.msra.mxu0 0.0
      %2197 = vmatpush.msra.mxu0 0.0
      %v2198 = vand.u32 %v116, 4294901760
      %2199 = vmatpush.msra.mxu0 %v2198
      %v2200 = vand.u32 %v115, 4294901760
      %2201 = vmatpush.msra.mxu0 %v2200
      %v2202 = vand.u32 %v114, 4294901760
      %2203 = vmatpush.msra.mxu0 %v2202
      %v2204 = vand.u32 %v113, 4294901760
      %2205 = vmatpush.msra.mxu0 %v2204
      %v2206 = vand.u32 %v112, 4294901760
      %2207 = vmatpush.msra.mxu0 %v2206
      %v2208 = vand.u32 %v111, 4294901760
      %2209 = vmatpush.msra.mxu0 %v2208
      %v2210 = vand.u32 %v110, 4294901760
      %2211 = vmatpush.msra.mxu0 %v2210
      %v2212 = vand.u32 %v109, 4294901760
      %2213 = vmatpush.msra.mxu0 %v2212
      %v2214 = vand.u32 %v1980, 4294901760
      %2215 = vmatmul.f32.gmra.mxu0 %v2214
      %v2216 = vpop.f32.mrf.mxu0
      %v2217 = vadd.f32 %v2188, %v2216
      %2218 = vdwg.mxu0
      %v2219 = vtanh.pop %v2217
      %p2220 = scmp.eq.s32.totalorder %s124, 0
      %v2221 = vmul.f32 %v134, 0.85
      %v2222 = vmul.f32 %v135, 0.85
      %v2223 = vsub.f32 0.0, %v1036
      %v2224 = vsub.f32 0.0, %v1051
      %v2225 = vmul.f32 %v2223, 1.442695
      %v2226 = vpow.pop %v2225
      %v2227 = vmul.f32 %v2224, 1.442695
      %v2228 = vpow.pop %v2227
      %v2229 = vmul.f32 %v2226, 0.15
      %v2230 = vmul.f32 %v2228, 0.15
      %v2231 = vadd.f32 %v2221, %v2229
      %v2232 = vadd.f32 %v2222, %v2230
      %s2233 = scalar_select %p2220, 1, 0
      %v2234 = vstv %s2233
      %vm2235 = vcmp.eq.s32.totalorder %v2234, 1
      %v2236 = vsel %vm2235, %v1036, %v2231
      %v2237 = vsel %vm2235, %v1051, %v2232
      %v2238 = vmul.f32 %v136, 0.85
      %v2239 = vmul.f32 %v137, 0.85
      %v2240 = vmul.f32 %v138, 0.85
      %v2241 = vmul.f32 %v139, 0.85
      %v2242 = vsub.f32 0.0, %v1596
      %v2243 = vsub.f32 0.0, %v1597
      %v2244 = vsub.f32 0.0, %v1612
      %v2245 = vsub.f32 0.0, %v1613
      %v2246 = vmul.f32 %v2242, 1.442695
      %v2247 = vpow.pop %v2246
      %v2248 = vmul.f32 %v2243, 1.442695
      %v2249 = vpow.pop %v2248
      %v2250 = vmul.f32 %v2244, 1.442695
      %v2251 = vpow.pop %v2250
      %v2252 = vmul.f32 %v2245, 1.442695
      %v2253 = vpow.pop %v2252
      %v2254 = vmul.f32 %v2247, 0.15
      %v2255 = vmul.f32 %v2249, 0.15
      %v2256 = vmul.f32 %v2251, 0.15
      %v2257 = vmul.f32 %v2253, 0.15
      %v2258 = vadd.f32 %v2238, %v2254
      %v2259 = vadd.f32 %v2239, %v2255
      %v2260 = vadd.f32 %v2240, %v2256
      %v2261 = vadd.f32 %v2241, %v2257
      %v2262 = vsel %vm2235, %v1596, %v2258
      %v2263 = vsel %vm2235, %v1597, %v2259
      %v2264 = vsel %vm2235, %v1612, %v2260
      %v2265 = vsel %vm2235, %v1613, %v2261
      %s2266 = scalar_lea.vmem [#allocation2], %s140
      %vm2267 = vcmask 254976
      %2268 = vst.msk [vmem:[%s2266] sm:$0x3] %vm2267, %v2219
      %v2269 = vsel %vm984, %v1210, %v1056
      %s2271 = scalar_lea.vmem [#allocation4], %s140
      %2272 = vst.msk [vmem:[%s2271] sm:$0x3] %vm987, %v2269
      %v2273 = vsel %vm984, %v1801, %v1624
      %s2275 = scalar_lea.vmem [#allocation6], %s140
      %2276 = vst.msk [vmem:[%s2275] sm:$0x3] %vm1529, %v2273
      %2279 = vset.pattern.permute.xlu0 0
      %2280 = vperm.xlu0 %2279, %v2236
      %v2281 = vpop.permute.xlu0 %2280
      %2282 = vset.pattern.permute.xlu0 0
      %2283 = vperm.xlu0 %2282, %v2237
      %v2284 = vpop.permute.xlu0 %2283
      %v2285 = vperm.slane %v2281, %v981
      %v2286 = vperm.slane %v2284, %v981
      %v2287 = vsel %vm984, %v2286, %v2285
      %s2289 = scalar_lea.vmem [#allocation7], %s140
      %2290 = vst.msk [vmem:[%s2289] sm:$0x3] %vm987, %v2287
      %2295 = vset.pattern.permute.xlu0 0
      %2296 = vperm.xlu0 %2295, %v2262
      %v2297 = vpop.permute.xlu0 %2296
      %2298 = vset.pattern.permute.xlu0 0
      %2299 = vperm.xlu0 %2298, %v2263
      %v2300 = vpop.permute.xlu0 %2299
      %2301 = vset.pattern.permute.xlu0 0
      %2302 = vperm.xlu0 %2301, %v2264
      %v2303 = vpop.permute.xlu0 %2302
      %2304 = vset.pattern.permute.xlu0 0
      %2305 = vperm.xlu0 %2304, %v2265
      %v2306 = vpop.permute.xlu0 %2305
      %v2307 = vperm.slane %v2297, %v981
      %v2308 = vperm.slane %v2300, %v1520
      %v2309 = vsel %vm1522, %v2308, %v2307
      %v2310 = vperm.slane %v2303, %v981
      %v2311 = vperm.slane %v2306, %v1520
      %v2312 = vsel %vm1522, %v2311, %v2310
      %v2313 = vsel %vm984, %v2312, %v2309
      %s2315 = scalar_lea.vmem [#allocation9], %s140
      %2316 = vst.msk [vmem:[%s2315] sm:$0x3] %vm1529, %v2313
      %2319 = vrot.lane.b32.xlu0 %v425, 96
      %v2320 = vpop.permute.xlu0 %2319
      %2323 = vrot.lane.b32.xlu0 %v718, 96
      %v2324 = vpop.permute.xlu0 %2323
    $region78: #{memory_decoder_forward.1} parent=1 // loop_footer
      %s128 = sadd.s32 1, %s124
    $region79: #{memory_decoder_forward.1} parent=1 // loop_footer_branch
      %123 = sbr.rel target = $region75
    $region80: #{memory_decoder_forward.1} parent=1 // loop_exit
      _
    %vm2326 = vcmask 254976
    %2327 = vst.msk [vmem:[#allocation10] sm:$0x3] %vm2326, %v129
    %s2328 = scalar_lea.vmem [#allocation10], 2
    %2329 = vst.msk [vmem:[%s2328] sm:$0x3] %vm2326, %v130
    %2330 = vst.msk [vmem:[#allocation12] sm:$0x3] %vm2326, %v131
    %s2331 = scalar_lea.vmem [#allocation12], 2
    %2332 = vst.msk [vmem:[%s2331] sm:$0x3] %vm2326, %v132
    // Predicated region
    $region81: #{memory_decoder_forward.1} parent=1 // pred_check
      _
    $region82: #{memory_decoder_forward.1} parent=1 // pred_check_branch
      %2334 = sbr.rel (0) target = $region84
    $region83: #{memory_decoder_forward.1} parent=1 // pred_region
      %2336 = vsyncadd [#allocation3], 0
      %s2337 = sshll.u32 [#allocation2], 4
      %s2338 = int_to_ptr.vmem [resolvable:$true] %s2337
      %s2339 = sshll.u32 %s18, 4
      %s2340 = int_to_ptr.hbm [resolvable:$true] %s2339
      %2345 = dma.vmem_to_hbm [thread:$0]  %s2338, 128, %s2340, [#allocation3], 32, 32, 2
    $region84: #{memory_decoder_forward.1} parent=1 // pred_fallthru
      _
    // Predicated region
    $region85: #{memory_decoder_forward.1} parent=1 // pred_check
      _
    $region86: #{memory_decoder_forward.1} parent=1 // pred_check_branch
      %2347 = sbr.rel (0) target = $region88
    $region87: #{memory_decoder_forward.1} parent=1 // pred_region
      %2349 = vsyncadd [#allocation5], 0
      %s2350 = sshll.u32 [#allocation4], 4
      %s2351 = int_to_ptr.vmem [resolvable:$true] %s2350
      %s2352 = sshll.u32 %s19, 4
      %s2353 = int_to_ptr.hbm [resolvable:$true] %s2352
      %2358 = dma.vmem_to_hbm [thread:$0]  %s2351, 128, %s2353, [#allocation5], 32, 32, 2
    $region88: #{memory_decoder_forward.1} parent=1 // pred_fallthru
      _
    // Predicated region
    $region89: #{memory_decoder_forward.1} parent=1 // pred_check
      _
    $region90: #{memory_decoder_forward.1} parent=1 // pred_check_branch
      %2360 = sbr.rel (0) target = $region92
    $region91: #{memory_decoder_forward.1} parent=1 // pred_region
      %2362 = vsyncadd [#allocation5], 0
      %s2363 = sshll.u32 [#allocation6], 4
      %s2364 = int_to_ptr.vmem [resolvable:$true] %s2363
      %s2365 = sshll.u32 %s20, 4
      %s2366 = int_to_ptr.hbm [resolvable:$true] %s2365
      %2371 = dma.vmem_to_hbm [thread:$0]  %s2364, 128, %s2366, [#allocation5], 32, 32, 2
    $region92: #{memory_decoder_forward.1} parent=1 // pred_fallthru
      _
    // Predicated region
    $region93: #{memory_decoder_forward.1} parent=1 // pred_check
      _
    $region94: #{memory_decoder_forward.1} parent=1 // pred_check_branch
      %2373 = sbr.rel (0) target = $region96
    $region95: #{memory_decoder_forward.1} parent=1 // pred_region
      %2375 = vsyncadd [#allocation8], 0
      %s2376 = sshll.u32 [#allocation7], 4
      %s2377 = int_to_ptr.vmem [resolvable:$true] %s2376
      %s2378 = sshll.u32 %s21, 4
      %s2379 = int_to_ptr.hbm [resolvable:$true] %s2378
      %2384 = dma.vmem_to_hbm [thread:$0]  %s2377, 128, %s2379, [#allocation8], 32, 32, 2
    $region96: #{memory_decoder_forward.1} parent=1 // pred_fallthru
      _
    // Predicated region
    $region97: #{memory_decoder_forward.1} parent=1 // pred_check
      _
    $region98: #{memory_decoder_forward.1} parent=1 // pred_check_branch
      %2386 = sbr.rel (0) target = $region100
    $region99: #{memory_decoder_forward.1} parent=1 // pred_region
      %2388 = vsyncadd [#allocation8], 0
      %s2389 = sshll.u32 [#allocation9], 4
      %s2390 = int_to_ptr.vmem [resolvable:$true] %s2389
      %s2391 = sshll.u32 %s22, 4
      %s2392 = int_to_ptr.hbm [resolvable:$true] %s2391
      %2397 = dma.vmem_to_hbm [thread:$0]  %s2390, 128, %s2392, [#allocation8], 32, 32, 2
    $region100: #{memory_decoder_forward.1} parent=1 // pred_fallthru
      _
    // Predicated region
    $region101: #{memory_decoder_forward.1} parent=1 // pred_check
      _
    $region102: #{memory_decoder_forward.1} parent=1 // pred_check_branch
      %2399 = sbr.rel (0) target = $region104
    $region103: #{memory_decoder_forward.1} parent=1 // pred_region
      %2401 = vsyncadd [#allocation11], 0
      %s2402 = sshll.u32 [#allocation10], 4
      %s2403 = int_to_ptr.vmem [resolvable:$true] %s2402
      %s2404 = sshll.u32 %s23, 4
      %s2405 = int_to_ptr.hbm [resolvable:$true] %s2404
      %2410 = dma.vmem_to_hbm [thread:$0]  %s2403, 64, %s2405, [#allocation11], 32, 32, 2
    $region104: #{memory_decoder_forward.1} parent=1 // pred_fallthru
      _
    // Predicated region
    $region105: #{memory_decoder_forward.1} parent=1 // pred_check
      _
    $region106: #{memory_decoder_forward.1} parent=1 // pred_check_branch
      %2412 = sbr.rel (0) target = $region108
    $region107: #{memory_decoder_forward.1} parent=1 // pred_region
      %2414 = vsyncadd [#allocation11], 0
      %s2415 = sshll.u32 [#allocation12], 4
      %s2416 = int_to_ptr.vmem [resolvable:$true] %s2415
      %s2417 = sshll.u32 %s24, 4
      %s2418 = int_to_ptr.hbm [resolvable:$true] %s2417
      %2423 = dma.vmem_to_hbm [thread:$0]  %s2416, 64, %s2418, [#allocation11], 32, 32, 2
    $region108: #{memory_decoder_forward.1} parent=1 // pred_fallthru
      _
    // Predicated region
    $region109: #{memory_decoder_forward.1} parent=1 // pred_check
      _
    $region110: #{memory_decoder_forward.1} parent=1 // pred_check_branch
      %2425 = sbr.rel (0) target = $region112
    $region111: #{memory_decoder_forward.1} parent=1 // pred_region
      %2427 = dma.done [#allocation3], 128
    $region112: #{memory_decoder_forward.1} parent=1 // pred_fallthru
      _
    // Predicated region
    $region113: #{memory_decoder_forward.1} parent=1 // pred_check
      _
    $region114: #{memory_decoder_forward.1} parent=1 // pred_check_branch
      %2429 = sbr.rel (0) target = $region116
    $region115: #{memory_decoder_forward.1} parent=1 // pred_region
      %2431 = dma.done [#allocation5], 128
    $region116: #{memory_decoder_forward.1} parent=1 // pred_fallthru
      _
    // Predicated region
    $region117: #{memory_decoder_forward.1} parent=1 // pred_check
      _
    $region118: #{memory_decoder_forward.1} parent=1 // pred_check_branch
      %2433 = sbr.rel (0) target = $region120
    $region119: #{memory_decoder_forward.1} parent=1 // pred_region
      %2435 = dma.done [#allocation5], 128
    $region120: #{memory_decoder_forward.1} parent=1 // pred_fallthru
      _
    // Predicated region
    $region121: #{memory_decoder_forward.1} parent=1 // pred_check
      _
    $region122: #{memory_decoder_forward.1} parent=1 // pred_check_branch
      %2437 = sbr.rel (0) target = $region124
    $region123: #{memory_decoder_forward.1} parent=1 // pred_region
      %2439 = dma.done [#allocation8], 128
    $region124: #{memory_decoder_forward.1} parent=1 // pred_fallthru
      _
    // Predicated region
    $region125: #{memory_decoder_forward.1} parent=1 // pred_check
      _
    $region126: #{memory_decoder_forward.1} parent=1 // pred_check_branch
      %2441 = sbr.rel (0) target = $region128
    $region127: #{memory_decoder_forward.1} parent=1 // pred_region
      %2443 = dma.done [#allocation8], 128
    $region128: #{memory_decoder_forward.1} parent=1 // pred_fallthru
      _
    // Predicated region
    $region129: #{memory_decoder_forward.1} parent=1 // pred_check
      _
    $region130: #{memory_decoder_forward.1} parent=1 // pred_check_branch
      %2445 = sbr.rel (0) target = $region132
    $region131: #{memory_decoder_forward.1} parent=1 // pred_region
      %2447 = dma.done [#allocation11], 64
    $region132: #{memory_decoder_forward.1} parent=1 // pred_fallthru
      _
    // Predicated region
    $region133: #{memory_decoder_forward.1} parent=1 // pred_check
      _
    $region134: #{memory_decoder_forward.1} parent=1 // pred_check_branch
      %2449 = sbr.rel (0) target = $region136
    $region135: #{memory_decoder_forward.1} parent=1 // pred_region
      %2451 = dma.done [#allocation11], 64
    $region136: #{memory_decoder_forward.1} parent=1 // pred_fallthru
      _
    %2452 = vsyncpa [#allocation3], 1
    %2453 = vsyncpa [#allocation5], 1
    %2454 = vsyncpa [#allocation8], 1
    %2455 = vsyncpa [#allocation11], 1

</llo_original>
